<compile_context>
chip_gen: v7x
topology: tpu7x:2x2x1
jax: 0.10.0
libtpu: 0.0.40
codegen_flags: <defaults>
</compile_context>

<pallas_src>
import jax
import jax.numpy as jnp
from jax.experimental import pallas as pl
from jax.experimental.pallas import tpu as pltpu

# ---- model hyper-parameters (from the module definition) --------------------
OUT_CH = 2                      # module's `output_channels`
C_IN = OUT_CH                   # conv2 in_channels
C_OUT = OUT_CH * 2              # conv2 out_channels
KH, KW = 3, 5
DIL_W = 3
PAD_H, PAD_W = (KH - 1) // 2, (KW - 1) * DIL_W // 2      # (1, 6) -> "same"
H = 60                          # required: C_OUT * H == OUT_CH * 120
W = 16
N = 2                           # batch (packed 2-per-vreg along lanes)
HID = 128
LANES = 128                     # N * 64 lanes: [b0: 0..59 | pad | b1: 64..123 | pad]
NEG_SLOPE = 0.01                # F.leaky_relu default


def _leaky(x):
    # identical to where(x > 0, x, 0.01 * x) for slope in [0, 1]; 2 VPU ops/vreg
    return jnp.maximum(x, NEG_SLOPE * x)


# ---------------------------- fused Pallas kernel -----------------------------
def cnn2_fused_kernel(xs_ref, cw_ref, cb_ref, w1_ref, b1_ref, w2_ref, b2_ref,
                      o_ref):
    # xs_ref: (C_IN, KH, KW, W, 128) VMEM  pre-shifted conv windows, batch in lanes
    # cw_ref: (C_OUT*C_IN*KH*KW,)    SMEM  flat OIHW conv weight
    # cb_ref: (C_OUT,)               SMEM  conv bias
    # w1_ref: (C_OUT, H, HID)        VMEM  lineal1 weight, transposed & split per co
    # b1_ref: (1, HID)               VMEM
    # w2_ref: (1, HID)               VMEM
    # b2_ref: (1,)                   SMEM
    # o_ref:  (N*W, 1)               VMEM  rows = [batch0 w0..w15, batch1 w0..w15]

    # ---- dilated 3x5 conv, both batch elements per vreg, bias in the init ----
    accs = [jnp.zeros((W, LANES), jnp.float32) + cb_ref[co] for co in range(C_OUT)]
    for c in range(C_IN):
        for kh in range(KH):
            for kw in range(KW):
                patch = xs_ref[c, kh, kw]            # aligned (W, 128) load
                for co in range(C_OUT):
                    wv = cw_ref[((co * C_IN + c) * KH + kh) * KW + kw]
                    accs[co] = accs[co] + wv * patch

    # ---- lineal1 (1x1 conv over C_OUT*H=240 channels) ------------------------
    # Unpack the lane-packed batches into (2W, H) tiles and run 4 accumulated
    # (32, 60) @ (60, 128) matmuls; the (32, 128) result is lane-dense.
    h = b1_ref[...]                                  # (1, HID), broadcasts
    for co in range(C_OUT):
        a = _leaky(accs[co])
        x_co = jnp.concatenate([a[:, 0:H], a[:, 64:64 + H]], axis=0)   # (2W, H)
        h = h + jnp.dot(x_co, w1_ref[co], preferred_element_type=jnp.float32)
    h = _leaky(h)                                    # (2W, HID)

    # ---- lineal2 (128 -> 1): exact f32 broadcast-multiply + lane reduction ---
    o_ref[...] = jnp.sum(h * w2_ref[...], axis=-1, keepdims=True) + b2_ref[0]


# --------------------------------- wrapper ------------------------------------
@jax.jit
def cnn2_forward(x, params):
    conv_w, conv_b, w1, b1, w2, b2 = params
    n = x.shape[0]
    assert n == N and x.shape[1:] == (C_IN, H, W), x.shape

    # Layout plumbing (host-side, tiny, fused under jit): W-major transpose,
    # "same" padding, gather all 15 (kh,kw) windows, pack batch along lanes.
    xt = jnp.swapaxes(x, 2, 3)                                   # (N, C_IN, W, H)
    xp = jnp.pad(xt, ((0, 0), (0, 0), (PAD_W, PAD_W), (PAD_H, PAD_H)))
    wins = jnp.stack(
        [jnp.stack([xp[:, :, DIL_W * kw:DIL_W * kw + W, kh:kh + H]
                    for kw in range(KW)], axis=0)
         for kh in range(KH)], axis=0)                           # (KH, KW, N, C_IN, W, H)
    wins = jnp.transpose(wins, (3, 0, 1, 4, 2, 5))               # (C_IN, KH, KW, W, N, H)
    wins = jnp.pad(wins, ((0, 0),) * 5 + ((0, LANES // N - H),)) # pad H 60 -> 64
    xs = wins.reshape(C_IN, KH, KW, W, LANES)                    # batch n -> lanes [64n, 64n+H)

    # Pre-transposed / reshaped MLP params (constant-folded under jit).
    w1t = jnp.swapaxes(w1, 0, 1).reshape(C_OUT, H, HID)          # (C_OUT, H, HID)
    b1r = b1.reshape(1, HID)
    w2r = w2.reshape(1, HID)
    b2s = b2.reshape(1)

    flops = 2 * (N * C_OUT * H * W * C_IN * KH * KW            # conv MACs
                 + N * W * (C_OUT * H) * HID                   # lineal1
                 + N * W * HID)                                # lineal2
    bytes_accessed = 4 * (xs.size + w1t.size + b1r.size + w2r.size
                          + conv_w.size + conv_b.size + b2s.size + N * W)

    out = pl.pallas_call(
        cnn2_fused_kernel,
        out_shape=jax.ShapeDtypeStruct((N * W, 1), jnp.float32),
        in_specs=[
            pl.BlockSpec(memory_space=pltpu.MemorySpace.VMEM),   # xs (windows)
            pl.BlockSpec(memory_space=pltpu.MemorySpace.SMEM),   # conv_w flat
            pl.BlockSpec(memory_space=pltpu.MemorySpace.SMEM),   # conv_b
            pl.BlockSpec(memory_space=pltpu.MemorySpace.VMEM),   # w1t
            pl.BlockSpec(memory_space=pltpu.MemorySpace.VMEM),   # b1
            pl.BlockSpec(memory_space=pltpu.MemorySpace.VMEM),   # w2
            pl.BlockSpec(memory_space=pltpu.MemorySpace.SMEM),   # b2
        ],
        out_specs=pl.BlockSpec(memory_space=pltpu.MemorySpace.VMEM),
        cost_estimate=pl.CostEstimate(flops=flops, transcendentals=0,
                                      bytes_accessed=bytes_accessed),
    )(xs, conv_w.reshape(-1), conv_b, w1t, b1r, w2r, b2s)

    # (N*W, 1) -> (N, 1, W): rows are [batch0 w0..w15, batch1 w0..w15];
    # pure metadata reshape (same memory order).
    return out.reshape(N, 1, W)


# ----------------------------- pure-JAX reference ------------------------------
def reference(x, params):
    conv_w, conv_b, w1, b1, w2, b2 = params
    y = jax.lax.conv_general_dilated(
        x, conv_w, window_strides=(1, 1),
        padding=((PAD_H, PAD_H), (PAD_W, PAD_W)),
        rhs_dilation=(1, DIL_W),
        dimension_numbers=("NCHW", "OIHW", "NCHW"))
    y = _leaky(y + conv_b[None, :, None, None])
    y = y.reshape(y.shape[0], C_OUT * H, W)
    h = _leaky(jnp.einsum("oi,niw->now", w1, y) + b1[None])
    return jnp.einsum("oi,niw->now", w2, h) + b2[None]


if __name__ == "__main__":
    key = jax.random.PRNGKey(0)
    ks = jax.random.split(key, 7)
    x = jax.random.normal(ks[0], (N, C_IN, H, W), jnp.float32)
    conv_w = jax.random.normal(ks[1], (C_OUT, C_IN, KH, KW), jnp.float32) * 0.1
    conv_b = jax.random.normal(ks[2], (C_OUT,), jnp.float32) * 0.1
    w1 = jax.random.normal(ks[3], (HID, C_OUT * H), jnp.float32) * 0.05
    b1 = jax.random.normal(ks[4], (HID, 1), jnp.float32) * 0.05
    w2 = jax.random.normal(ks[5], (1, HID), jnp.float32) * 0.05
    b2 = jax.random.normal(ks[6], (1, 1), jnp.float32) * 0.05
    params = (conv_w, conv_b, w1, b1, w2, b2)

    out = jax.block_until_ready(cnn2_forward(x, params))
    ref = jax.block_until_ready(reference(x, params))
    assert out.shape == (N, 1, W), out.shape
    err = float(jnp.max(jnp.abs(out - ref)))
    assert jnp.allclose(out, ref, rtol=1e-4, atol=1e-4), f"max abs err {err}"
    print("KERNEL_OK")
</pallas_src>

<mosaic_0001>
module attributes {stable_mosaic.version = 11 : i64} {
  func.func @cnn2_fused_kernel(%arg0: memref<2x3x5x16x128xf32, #tpu.memory_space<vmem>>, %arg1: memref<120xf32, #tpu.memory_space<smem>>, %arg2: memref<4xf32, #tpu.memory_space<smem>>, %arg3: memref<4x60x128xf32, #tpu.memory_space<vmem>>, %arg4: memref<1x128xf32, #tpu.memory_space<vmem>>, %arg5: memref<1x128xf32, #tpu.memory_space<vmem>>, %arg6: memref<1xf32, #tpu.memory_space<smem>>, %arg7: memref<32x1xf32, #tpu.memory_space<vmem>>) attributes {dimension_semantics = [], scalar_prefetch = 0 : i64, scratch_operands = 0 : i64, tpu.core_type = #tpu.core_type<tc>} {
    %cst = arith.constant 0.000000e+00 : f32
    %0 = vector.broadcast %cst : f32 to vector<16x128xf32>
    %c0 = arith.constant 0 : index
    %1 = memref.load %arg2[%c0] : memref<4xf32, #tpu.memory_space<smem>>
    %2 = vector.broadcast %1 : f32 to vector<16x128xf32>
    %3 = arith.addf %0, %2 : vector<16x128xf32>
    %cst_0 = arith.constant 0.000000e+00 : f32
    %4 = vector.broadcast %cst_0 : f32 to vector<16x128xf32>
    %c1 = arith.constant 1 : index
    %5 = memref.load %arg2[%c1] : memref<4xf32, #tpu.memory_space<smem>>
    %6 = vector.broadcast %5 : f32 to vector<16x128xf32>
    %7 = arith.addf %4, %6 : vector<16x128xf32>
    %cst_1 = arith.constant 0.000000e+00 : f32
    %8 = vector.broadcast %cst_1 : f32 to vector<16x128xf32>
    %c2 = arith.constant 2 : index
    %9 = memref.load %arg2[%c2] : memref<4xf32, #tpu.memory_space<smem>>
    %10 = vector.broadcast %9 : f32 to vector<16x128xf32>
    %11 = arith.addf %8, %10 : vector<16x128xf32>
    %cst_2 = arith.constant 0.000000e+00 : f32
    %12 = vector.broadcast %cst_2 : f32 to vector<16x128xf32>
    %c3 = arith.constant 3 : index
    %13 = memref.load %arg2[%c3] : memref<4xf32, #tpu.memory_space<smem>>
    %14 = vector.broadcast %13 : f32 to vector<16x128xf32>
    %15 = arith.addf %12, %14 : vector<16x128xf32>
    %c0_3 = arith.constant 0 : index
    %c0_4 = arith.constant 0 : index
    %c0_5 = arith.constant 0 : index
    %c0_6 = arith.constant 0 : index
    %c0_7 = arith.constant 0 : index
    %16 = vector.load %arg0[%c0_3, %c0_4, %c0_5, %c0_6, %c0_7] : memref<2x3x5x16x128xf32, #tpu.memory_space<vmem>>, vector<1x1x1x16x128xf32>
    %17 = vector.shape_cast %16 : vector<1x1x1x16x128xf32> to vector<16x128xf32>
    %c0_8 = arith.constant 0 : index
    %18 = memref.load %arg1[%c0_8] : memref<120xf32, #tpu.memory_space<smem>>
    %19 = vector.broadcast %18 : f32 to vector<16x128xf32>
    %20 = arith.mulf %19, %17 : vector<16x128xf32>
    %21 = arith.addf %3, %20 : vector<16x128xf32>
    %c30 = arith.constant 30 : index
    %22 = memref.load %arg1[%c30] : memref<120xf32, #tpu.memory_space<smem>>
    %23 = vector.broadcast %22 : f32 to vector<16x128xf32>
    %24 = arith.mulf %23, %17 : vector<16x128xf32>
    %25 = arith.addf %7, %24 : vector<16x128xf32>
    %c60 = arith.constant 60 : index
    %26 = memref.load %arg1[%c60] : memref<120xf32, #tpu.memory_space<smem>>
    %27 = vector.broadcast %26 : f32 to vector<16x128xf32>
    %28 = arith.mulf %27, %17 : vector<16x128xf32>
    %29 = arith.addf %11, %28 : vector<16x128xf32>
    %c90 = arith.constant 90 : index
    %30 = memref.load %arg1[%c90] : memref<120xf32, #tpu.memory_space<smem>>
    %31 = vector.broadcast %30 : f32 to vector<16x128xf32>
    %32 = arith.mulf %31, %17 : vector<16x128xf32>
    %33 = arith.addf %15, %32 : vector<16x128xf32>
    %c0_9 = arith.constant 0 : index
    %c0_10 = arith.constant 0 : index
    %c1_11 = arith.constant 1 : index
    %c0_12 = arith.constant 0 : index
    %c0_13 = arith.constant 0 : index
    %34 = vector.load %arg0[%c0_9, %c0_10, %c1_11, %c0_12, %c0_13] : memref<2x3x5x16x128xf32, #tpu.memory_space<vmem>>, vector<1x1x1x16x128xf32>
    %35 = vector.shape_cast %34 : vector<1x1x1x16x128xf32> to vector<16x128xf32>
    %c1_14 = arith.constant 1 : index
    %36 = memref.load %arg1[%c1_14] : memref<120xf32, #tpu.memory_space<smem>>
    %37 = vector.broadcast %36 : f32 to vector<16x128xf32>
    %38 = arith.mulf %37, %35 : vector<16x128xf32>
    %39 = arith.addf %21, %38 : vector<16x128xf32>
    %c31 = arith.constant 31 : index
    %40 = memref.load %arg1[%c31] : memref<120xf32, #tpu.memory_space<smem>>
    %41 = vector.broadcast %40 : f32 to vector<16x128xf32>
    %42 = arith.mulf %41, %35 : vector<16x128xf32>
    %43 = arith.addf %25, %42 : vector<16x128xf32>
    %c61 = arith.constant 61 : index
    %44 = memref.load %arg1[%c61] : memref<120xf32, #tpu.memory_space<smem>>
    %45 = vector.broadcast %44 : f32 to vector<16x128xf32>
    %46 = arith.mulf %45, %35 : vector<16x128xf32>
    %47 = arith.addf %29, %46 : vector<16x128xf32>
    %c91 = arith.constant 91 : index
    %48 = memref.load %arg1[%c91] : memref<120xf32, #tpu.memory_space<smem>>
    %49 = vector.broadcast %48 : f32 to vector<16x128xf32>
    %50 = arith.mulf %49, %35 : vector<16x128xf32>
    %51 = arith.addf %33, %50 : vector<16x128xf32>
    %c0_15 = arith.constant 0 : index
    %c0_16 = arith.constant 0 : index
    %c2_17 = arith.constant 2 : index
    %c0_18 = arith.constant 0 : index
    %c0_19 = arith.constant 0 : index
    %52 = vector.load %arg0[%c0_15, %c0_16, %c2_17, %c0_18, %c0_19] : memref<2x3x5x16x128xf32, #tpu.memory_space<vmem>>, vector<1x1x1x16x128xf32>
    %53 = vector.shape_cast %52 : vector<1x1x1x16x128xf32> to vector<16x128xf32>
    %c2_20 = arith.constant 2 : index
    %54 = memref.load %arg1[%c2_20] : memref<120xf32, #tpu.memory_space<smem>>
    %55 = vector.broadcast %54 : f32 to vector<16x128xf32>
    %56 = arith.mulf %55, %53 : vector<16x128xf32>
    %57 = arith.addf %39, %56 : vector<16x128xf32>
    %c32 = arith.constant 32 : index
    %58 = memref.load %arg1[%c32] : memref<120xf32, #tpu.memory_space<smem>>
    %59 = vector.broadcast %58 : f32 to vector<16x128xf32>
    %60 = arith.mulf %59, %53 : vector<16x128xf32>
    %61 = arith.addf %43, %60 : vector<16x128xf32>
    %c62 = arith.constant 62 : index
    %62 = memref.load %arg1[%c62] : memref<120xf32, #tpu.memory_space<smem>>
    %63 = vector.broadcast %62 : f32 to vector<16x128xf32>
    %64 = arith.mulf %63, %53 : vector<16x128xf32>
    %65 = arith.addf %47, %64 : vector<16x128xf32>
    %c92 = arith.constant 92 : index
    %66 = memref.load %arg1[%c92] : memref<120xf32, #tpu.memory_space<smem>>
    %67 = vector.broadcast %66 : f32 to vector<16x128xf32>
    %68 = arith.mulf %67, %53 : vector<16x128xf32>
    %69 = arith.addf %51, %68 : vector<16x128xf32>
    %c0_21 = arith.constant 0 : index
    %c0_22 = arith.constant 0 : index
    %c3_23 = arith.constant 3 : index
    %c0_24 = arith.constant 0 : index
    %c0_25 = arith.constant 0 : index
    %70 = vector.load %arg0[%c0_21, %c0_22, %c3_23, %c0_24, %c0_25] : memref<2x3x5x16x128xf32, #tpu.memory_space<vmem>>, vector<1x1x1x16x128xf32>
    %71 = vector.shape_cast %70 : vector<1x1x1x16x128xf32> to vector<16x128xf32>
    %c3_26 = arith.constant 3 : index
    %72 = memref.load %arg1[%c3_26] : memref<120xf32, #tpu.memory_space<smem>>
    %73 = vector.broadcast %72 : f32 to vector<16x128xf32>
    %74 = arith.mulf %73, %71 : vector<16x128xf32>
    %75 = arith.addf %57, %74 : vector<16x128xf32>
    %c33 = arith.constant 33 : index
    %76 = memref.load %arg1[%c33] : memref<120xf32, #tpu.memory_space<smem>>
    %77 = vector.broadcast %76 : f32 to vector<16x128xf32>
    %78 = arith.mulf %77, %71 : vector<16x128xf32>
    %79 = arith.addf %61, %78 : vector<16x128xf32>
    %c63 = arith.constant 63 : index
    %80 = memref.load %arg1[%c63] : memref<120xf32, #tpu.memory_space<smem>>
    %81 = vector.broadcast %80 : f32 to vector<16x128xf32>
    %82 = arith.mulf %81, %71 : vector<16x128xf32>
    %83 = arith.addf %65, %82 : vector<16x128xf32>
    %c93 = arith.constant 93 : index
    %84 = memref.load %arg1[%c93] : memref<120xf32, #tpu.memory_space<smem>>
    %85 = vector.broadcast %84 : f32 to vector<16x128xf32>
    %86 = arith.mulf %85, %71 : vector<16x128xf32>
    %87 = arith.addf %69, %86 : vector<16x128xf32>
    %c0_27 = arith.constant 0 : index
    %c0_28 = arith.constant 0 : index
    %c4 = arith.constant 4 : index
    %c0_29 = arith.constant 0 : index
    %c0_30 = arith.constant 0 : index
    %88 = vector.load %arg0[%c0_27, %c0_28, %c4, %c0_29, %c0_30] : memref<2x3x5x16x128xf32, #tpu.memory_space<vmem>>, vector<1x1x1x16x128xf32>
    %89 = vector.shape_cast %88 : vector<1x1x1x16x128xf32> to vector<16x128xf32>
    %c4_31 = arith.constant 4 : index
    %90 = memref.load %arg1[%c4_31] : memref<120xf32, #tpu.memory_space<smem>>
    %91 = vector.broadcast %90 : f32 to vector<16x128xf32>
    %92 = arith.mulf %91, %89 : vector<16x128xf32>
    %93 = arith.addf %75, %92 : vector<16x128xf32>
    %c34 = arith.constant 34 : index
    %94 = memref.load %arg1[%c34] : memref<120xf32, #tpu.memory_space<smem>>
    %95 = vector.broadcast %94 : f32 to vector<16x128xf32>
    %96 = arith.mulf %95, %89 : vector<16x128xf32>
    %97 = arith.addf %79, %96 : vector<16x128xf32>
    %c64 = arith.constant 64 : index
    %98 = memref.load %arg1[%c64] : memref<120xf32, #tpu.memory_space<smem>>
    %99 = vector.broadcast %98 : f32 to vector<16x128xf32>
    %100 = arith.mulf %99, %89 : vector<16x128xf32>
    %101 = arith.addf %83, %100 : vector<16x128xf32>
    %c94 = arith.constant 94 : index
    %102 = memref.load %arg1[%c94] : memref<120xf32, #tpu.memory_space<smem>>
    %103 = vector.broadcast %102 : f32 to vector<16x128xf32>
    %104 = arith.mulf %103, %89 : vector<16x128xf32>
    %105 = arith.addf %87, %104 : vector<16x128xf32>
    %c0_32 = arith.constant 0 : index
    %c1_33 = arith.constant 1 : index
    %c0_34 = arith.constant 0 : index
    %c0_35 = arith.constant 0 : index
    %c0_36 = arith.constant 0 : index
    %106 = vector.load %arg0[%c0_32, %c1_33, %c0_34, %c0_35, %c0_36] : memref<2x3x5x16x128xf32, #tpu.memory_space<vmem>>, vector<1x1x1x16x128xf32>
    %107 = vector.shape_cast %106 : vector<1x1x1x16x128xf32> to vector<16x128xf32>
    %c5 = arith.constant 5 : index
    %108 = memref.load %arg1[%c5] : memref<120xf32, #tpu.memory_space<smem>>
    %109 = vector.broadcast %108 : f32 to vector<16x128xf32>
    %110 = arith.mulf %109, %107 : vector<16x128xf32>
    %111 = arith.addf %93, %110 : vector<16x128xf32>
    %c35 = arith.constant 35 : index
    %112 = memref.load %arg1[%c35] : memref<120xf32, #tpu.memory_space<smem>>
    %113 = vector.broadcast %112 : f32 to vector<16x128xf32>
    %114 = arith.mulf %113, %107 : vector<16x128xf32>
    %115 = arith.addf %97, %114 : vector<16x128xf32>
    %c65 = arith.constant 65 : index
    %116 = memref.load %arg1[%c65] : memref<120xf32, #tpu.memory_space<smem>>
    %117 = vector.broadcast %116 : f32 to vector<16x128xf32>
    %118 = arith.mulf %117, %107 : vector<16x128xf32>
    %119 = arith.addf %101, %118 : vector<16x128xf32>
    %c95 = arith.constant 95 : index
    %120 = memref.load %arg1[%c95] : memref<120xf32, #tpu.memory_space<smem>>
    %121 = vector.broadcast %120 : f32 to vector<16x128xf32>
    %122 = arith.mulf %121, %107 : vector<16x128xf32>
    %123 = arith.addf %105, %122 : vector<16x128xf32>
    %c0_37 = arith.constant 0 : index
    %c1_38 = arith.constant 1 : index
    %c1_39 = arith.constant 1 : index
    %c0_40 = arith.constant 0 : index
    %c0_41 = arith.constant 0 : index
    %124 = vector.load %arg0[%c0_37, %c1_38, %c1_39, %c0_40, %c0_41] : memref<2x3x5x16x128xf32, #tpu.memory_space<vmem>>, vector<1x1x1x16x128xf32>
    %125 = vector.shape_cast %124 : vector<1x1x1x16x128xf32> to vector<16x128xf32>
    %c6 = arith.constant 6 : index
    %126 = memref.load %arg1[%c6] : memref<120xf32, #tpu.memory_space<smem>>
    %127 = vector.broadcast %126 : f32 to vector<16x128xf32>
    %128 = arith.mulf %127, %125 : vector<16x128xf32>
    %129 = arith.addf %111, %128 : vector<16x128xf32>
    %c36 = arith.constant 36 : index
    %130 = memref.load %arg1[%c36] : memref<120xf32, #tpu.memory_space<smem>>
    %131 = vector.broadcast %130 : f32 to vector<16x128xf32>
    %132 = arith.mulf %131, %125 : vector<16x128xf32>
    %133 = arith.addf %115, %132 : vector<16x128xf32>
    %c66 = arith.constant 66 : index
    %134 = memref.load %arg1[%c66] : memref<120xf32, #tpu.memory_space<smem>>
    %135 = vector.broadcast %134 : f32 to vector<16x128xf32>
    %136 = arith.mulf %135, %125 : vector<16x128xf32>
    %137 = arith.addf %119, %136 : vector<16x128xf32>
    %c96 = arith.constant 96 : index
    %138 = memref.load %arg1[%c96] : memref<120xf32, #tpu.memory_space<smem>>
    %139 = vector.broadcast %138 : f32 to vector<16x128xf32>
    %140 = arith.mulf %139, %125 : vector<16x128xf32>
    %141 = arith.addf %123, %140 : vector<16x128xf32>
    %c0_42 = arith.constant 0 : index
    %c1_43 = arith.constant 1 : index
    %c2_44 = arith.constant 2 : index
    %c0_45 = arith.constant 0 : index
    %c0_46 = arith.constant 0 : index
    %142 = vector.load %arg0[%c0_42, %c1_43, %c2_44, %c0_45, %c0_46] : memref<2x3x5x16x128xf32, #tpu.memory_space<vmem>>, vector<1x1x1x16x128xf32>
    %143 = vector.shape_cast %142 : vector<1x1x1x16x128xf32> to vector<16x128xf32>
    %c7 = arith.constant 7 : index
    %144 = memref.load %arg1[%c7] : memref<120xf32, #tpu.memory_space<smem>>
    %145 = vector.broadcast %144 : f32 to vector<16x128xf32>
    %146 = arith.mulf %145, %143 : vector<16x128xf32>
    %147 = arith.addf %129, %146 : vector<16x128xf32>
    %c37 = arith.constant 37 : index
    %148 = memref.load %arg1[%c37] : memref<120xf32, #tpu.memory_space<smem>>
    %149 = vector.broadcast %148 : f32 to vector<16x128xf32>
    %150 = arith.mulf %149, %143 : vector<16x128xf32>
    %151 = arith.addf %133, %150 : vector<16x128xf32>
    %c67 = arith.constant 67 : index
    %152 = memref.load %arg1[%c67] : memref<120xf32, #tpu.memory_space<smem>>
    %153 = vector.broadcast %152 : f32 to vector<16x128xf32>
    %154 = arith.mulf %153, %143 : vector<16x128xf32>
    %155 = arith.addf %137, %154 : vector<16x128xf32>
    %c97 = arith.constant 97 : index
    %156 = memref.load %arg1[%c97] : memref<120xf32, #tpu.memory_space<smem>>
    %157 = vector.broadcast %156 : f32 to vector<16x128xf32>
    %158 = arith.mulf %157, %143 : vector<16x128xf32>
    %159 = arith.addf %141, %158 : vector<16x128xf32>
    %c0_47 = arith.constant 0 : index
    %c1_48 = arith.constant 1 : index
    %c3_49 = arith.constant 3 : index
    %c0_50 = arith.constant 0 : index
    %c0_51 = arith.constant 0 : index
    %160 = vector.load %arg0[%c0_47, %c1_48, %c3_49, %c0_50, %c0_51] : memref<2x3x5x16x128xf32, #tpu.memory_space<vmem>>, vector<1x1x1x16x128xf32>
    %161 = vector.shape_cast %160 : vector<1x1x1x16x128xf32> to vector<16x128xf32>
    %c8 = arith.constant 8 : index
    %162 = memref.load %arg1[%c8] : memref<120xf32, #tpu.memory_space<smem>>
    %163 = vector.broadcast %162 : f32 to vector<16x128xf32>
    %164 = arith.mulf %163, %161 : vector<16x128xf32>
    %165 = arith.addf %147, %164 : vector<16x128xf32>
    %c38 = arith.constant 38 : index
    %166 = memref.load %arg1[%c38] : memref<120xf32, #tpu.memory_space<smem>>
    %167 = vector.broadcast %166 : f32 to vector<16x128xf32>
    %168 = arith.mulf %167, %161 : vector<16x128xf32>
    %169 = arith.addf %151, %168 : vector<16x128xf32>
    %c68 = arith.constant 68 : index
    %170 = memref.load %arg1[%c68] : memref<120xf32, #tpu.memory_space<smem>>
    %171 = vector.broadcast %170 : f32 to vector<16x128xf32>
    %172 = arith.mulf %171, %161 : vector<16x128xf32>
    %173 = arith.addf %155, %172 : vector<16x128xf32>
    %c98 = arith.constant 98 : index
    %174 = memref.load %arg1[%c98] : memref<120xf32, #tpu.memory_space<smem>>
    %175 = vector.broadcast %174 : f32 to vector<16x128xf32>
    %176 = arith.mulf %175, %161 : vector<16x128xf32>
    %177 = arith.addf %159, %176 : vector<16x128xf32>
    %c0_52 = arith.constant 0 : index
    %c1_53 = arith.constant 1 : index
    %c4_54 = arith.constant 4 : index
    %c0_55 = arith.constant 0 : index
    %c0_56 = arith.constant 0 : index
    %178 = vector.load %arg0[%c0_52, %c1_53, %c4_54, %c0_55, %c0_56] : memref<2x3x5x16x128xf32, #tpu.memory_space<vmem>>, vector<1x1x1x16x128xf32>
    %179 = vector.shape_cast %178 : vector<1x1x1x16x128xf32> to vector<16x128xf32>
    %c9 = arith.constant 9 : index
    %180 = memref.load %arg1[%c9] : memref<120xf32, #tpu.memory_space<smem>>
    %181 = vector.broadcast %180 : f32 to vector<16x128xf32>
    %182 = arith.mulf %181, %179 : vector<16x128xf32>
    %183 = arith.addf %165, %182 : vector<16x128xf32>
    %c39 = arith.constant 39 : index
    %184 = memref.load %arg1[%c39] : memref<120xf32, #tpu.memory_space<smem>>
    %185 = vector.broadcast %184 : f32 to vector<16x128xf32>
    %186 = arith.mulf %185, %179 : vector<16x128xf32>
    %187 = arith.addf %169, %186 : vector<16x128xf32>
    %c69 = arith.constant 69 : index
    %188 = memref.load %arg1[%c69] : memref<120xf32, #tpu.memory_space<smem>>
    %189 = vector.broadcast %188 : f32 to vector<16x128xf32>
    %190 = arith.mulf %189, %179 : vector<16x128xf32>
    %191 = arith.addf %173, %190 : vector<16x128xf32>
    %c99 = arith.constant 99 : index
    %192 = memref.load %arg1[%c99] : memref<120xf32, #tpu.memory_space<smem>>
    %193 = vector.broadcast %192 : f32 to vector<16x128xf32>
    %194 = arith.mulf %193, %179 : vector<16x128xf32>
    %195 = arith.addf %177, %194 : vector<16x128xf32>
    %c0_57 = arith.constant 0 : index
    %c2_58 = arith.constant 2 : index
    %c0_59 = arith.constant 0 : index
    %c0_60 = arith.constant 0 : index
    %c0_61 = arith.constant 0 : index
    %196 = vector.load %arg0[%c0_57, %c2_58, %c0_59, %c0_60, %c0_61] : memref<2x3x5x16x128xf32, #tpu.memory_space<vmem>>, vector<1x1x1x16x128xf32>
    %197 = vector.shape_cast %196 : vector<1x1x1x16x128xf32> to vector<16x128xf32>
    %c10 = arith.constant 10 : index
    %198 = memref.load %arg1[%c10] : memref<120xf32, #tpu.memory_space<smem>>
    %199 = vector.broadcast %198 : f32 to vector<16x128xf32>
    %200 = arith.mulf %199, %197 : vector<16x128xf32>
    %201 = arith.addf %183, %200 : vector<16x128xf32>
    %c40 = arith.constant 40 : index
    %202 = memref.load %arg1[%c40] : memref<120xf32, #tpu.memory_space<smem>>
    %203 = vector.broadcast %202 : f32 to vector<16x128xf32>
    %204 = arith.mulf %203, %197 : vector<16x128xf32>
    %205 = arith.addf %187, %204 : vector<16x128xf32>
    %c70 = arith.constant 70 : index
    %206 = memref.load %arg1[%c70] : memref<120xf32, #tpu.memory_space<smem>>
    %207 = vector.broadcast %206 : f32 to vector<16x128xf32>
    %208 = arith.mulf %207, %197 : vector<16x128xf32>
    %209 = arith.addf %191, %208 : vector<16x128xf32>
    %c100 = arith.constant 100 : index
    %210 = memref.load %arg1[%c100] : memref<120xf32, #tpu.memory_space<smem>>
    %211 = vector.broadcast %210 : f32 to vector<16x128xf32>
    %212 = arith.mulf %211, %197 : vector<16x128xf32>
    %213 = arith.addf %195, %212 : vector<16x128xf32>
    %c0_62 = arith.constant 0 : index
    %c2_63 = arith.constant 2 : index
    %c1_64 = arith.constant 1 : index
    %c0_65 = arith.constant 0 : index
    %c0_66 = arith.constant 0 : index
    %214 = vector.load %arg0[%c0_62, %c2_63, %c1_64, %c0_65, %c0_66] : memref<2x3x5x16x128xf32, #tpu.memory_space<vmem>>, vector<1x1x1x16x128xf32>
    %215 = vector.shape_cast %214 : vector<1x1x1x16x128xf32> to vector<16x128xf32>
    %c11 = arith.constant 11 : index
    %216 = memref.load %arg1[%c11] : memref<120xf32, #tpu.memory_space<smem>>
    %217 = vector.broadcast %216 : f32 to vector<16x128xf32>
    %218 = arith.mulf %217, %215 : vector<16x128xf32>
    %219 = arith.addf %201, %218 : vector<16x128xf32>
    %c41 = arith.constant 41 : index
    %220 = memref.load %arg1[%c41] : memref<120xf32, #tpu.memory_space<smem>>
    %221 = vector.broadcast %220 : f32 to vector<16x128xf32>
    %222 = arith.mulf %221, %215 : vector<16x128xf32>
    %223 = arith.addf %205, %222 : vector<16x128xf32>
    %c71 = arith.constant 71 : index
    %224 = memref.load %arg1[%c71] : memref<120xf32, #tpu.memory_space<smem>>
    %225 = vector.broadcast %224 : f32 to vector<16x128xf32>
    %226 = arith.mulf %225, %215 : vector<16x128xf32>
    %227 = arith.addf %209, %226 : vector<16x128xf32>
    %c101 = arith.constant 101 : index
    %228 = memref.load %arg1[%c101] : memref<120xf32, #tpu.memory_space<smem>>
    %229 = vector.broadcast %228 : f32 to vector<16x128xf32>
    %230 = arith.mulf %229, %215 : vector<16x128xf32>
    %231 = arith.addf %213, %230 : vector<16x128xf32>
    %c0_67 = arith.constant 0 : index
    %c2_68 = arith.constant 2 : index
    %c2_69 = arith.constant 2 : index
    %c0_70 = arith.constant 0 : index
    %c0_71 = arith.constant 0 : index
    %232 = vector.load %arg0[%c0_67, %c2_68, %c2_69, %c0_70, %c0_71] : memref<2x3x5x16x128xf32, #tpu.memory_space<vmem>>, vector<1x1x1x16x128xf32>
    %233 = vector.shape_cast %232 : vector<1x1x1x16x128xf32> to vector<16x128xf32>
    %c12 = arith.constant 12 : index
    %234 = memref.load %arg1[%c12] : memref<120xf32, #tpu.memory_space<smem>>
    %235 = vector.broadcast %234 : f32 to vector<16x128xf32>
    %236 = arith.mulf %235, %233 : vector<16x128xf32>
    %237 = arith.addf %219, %236 : vector<16x128xf32>
    %c42 = arith.constant 42 : index
    %238 = memref.load %arg1[%c42] : memref<120xf32, #tpu.memory_space<smem>>
    %239 = vector.broadcast %238 : f32 to vector<16x128xf32>
    %240 = arith.mulf %239, %233 : vector<16x128xf32>
    %241 = arith.addf %223, %240 : vector<16x128xf32>
    %c72 = arith.constant 72 : index
    %242 = memref.load %arg1[%c72] : memref<120xf32, #tpu.memory_space<smem>>
    %243 = vector.broadcast %242 : f32 to vector<16x128xf32>
    %244 = arith.mulf %243, %233 : vector<16x128xf32>
    %245 = arith.addf %227, %244 : vector<16x128xf32>
    %c102 = arith.constant 102 : index
    %246 = memref.load %arg1[%c102] : memref<120xf32, #tpu.memory_space<smem>>
    %247 = vector.broadcast %246 : f32 to vector<16x128xf32>
    %248 = arith.mulf %247, %233 : vector<16x128xf32>
    %249 = arith.addf %231, %248 : vector<16x128xf32>
    %c0_72 = arith.constant 0 : index
    %c2_73 = arith.constant 2 : index
    %c3_74 = arith.constant 3 : index
    %c0_75 = arith.constant 0 : index
    %c0_76 = arith.constant 0 : index
    %250 = vector.load %arg0[%c0_72, %c2_73, %c3_74, %c0_75, %c0_76] : memref<2x3x5x16x128xf32, #tpu.memory_space<vmem>>, vector<1x1x1x16x128xf32>
    %251 = vector.shape_cast %250 : vector<1x1x1x16x128xf32> to vector<16x128xf32>
    %c13 = arith.constant 13 : index
    %252 = memref.load %arg1[%c13] : memref<120xf32, #tpu.memory_space<smem>>
    %253 = vector.broadcast %252 : f32 to vector<16x128xf32>
    %254 = arith.mulf %253, %251 : vector<16x128xf32>
    %255 = arith.addf %237, %254 : vector<16x128xf32>
    %c43 = arith.constant 43 : index
    %256 = memref.load %arg1[%c43] : memref<120xf32, #tpu.memory_space<smem>>
    %257 = vector.broadcast %256 : f32 to vector<16x128xf32>
    %258 = arith.mulf %257, %251 : vector<16x128xf32>
    %259 = arith.addf %241, %258 : vector<16x128xf32>
    %c73 = arith.constant 73 : index
    %260 = memref.load %arg1[%c73] : memref<120xf32, #tpu.memory_space<smem>>
    %261 = vector.broadcast %260 : f32 to vector<16x128xf32>
    %262 = arith.mulf %261, %251 : vector<16x128xf32>
    %263 = arith.addf %245, %262 : vector<16x128xf32>
    %c103 = arith.constant 103 : index
    %264 = memref.load %arg1[%c103] : memref<120xf32, #tpu.memory_space<smem>>
    %265 = vector.broadcast %264 : f32 to vector<16x128xf32>
    %266 = arith.mulf %265, %251 : vector<16x128xf32>
    %267 = arith.addf %249, %266 : vector<16x128xf32>
    %c0_77 = arith.constant 0 : index
    %c2_78 = arith.constant 2 : index
    %c4_79 = arith.constant 4 : index
    %c0_80 = arith.constant 0 : index
    %c0_81 = arith.constant 0 : index
    %268 = vector.load %arg0[%c0_77, %c2_78, %c4_79, %c0_80, %c0_81] : memref<2x3x5x16x128xf32, #tpu.memory_space<vmem>>, vector<1x1x1x16x128xf32>
    %269 = vector.shape_cast %268 : vector<1x1x1x16x128xf32> to vector<16x128xf32>
    %c14 = arith.constant 14 : index
    %270 = memref.load %arg1[%c14] : memref<120xf32, #tpu.memory_space<smem>>
    %271 = vector.broadcast %270 : f32 to vector<16x128xf32>
    %272 = arith.mulf %271, %269 : vector<16x128xf32>
    %273 = arith.addf %255, %272 : vector<16x128xf32>
    %c44 = arith.constant 44 : index
    %274 = memref.load %arg1[%c44] : memref<120xf32, #tpu.memory_space<smem>>
    %275 = vector.broadcast %274 : f32 to vector<16x128xf32>
    %276 = arith.mulf %275, %269 : vector<16x128xf32>
    %277 = arith.addf %259, %276 : vector<16x128xf32>
    %c74 = arith.constant 74 : index
    %278 = memref.load %arg1[%c74] : memref<120xf32, #tpu.memory_space<smem>>
    %279 = vector.broadcast %278 : f32 to vector<16x128xf32>
    %280 = arith.mulf %279, %269 : vector<16x128xf32>
    %281 = arith.addf %263, %280 : vector<16x128xf32>
    %c104 = arith.constant 104 : index
    %282 = memref.load %arg1[%c104] : memref<120xf32, #tpu.memory_space<smem>>
    %283 = vector.broadcast %282 : f32 to vector<16x128xf32>
    %284 = arith.mulf %283, %269 : vector<16x128xf32>
    %285 = arith.addf %267, %284 : vector<16x128xf32>
    %c1_82 = arith.constant 1 : index
    %c0_83 = arith.constant 0 : index
    %c0_84 = arith.constant 0 : index
    %c0_85 = arith.constant 0 : index
    %c0_86 = arith.constant 0 : index
    %286 = vector.load %arg0[%c1_82, %c0_83, %c0_84, %c0_85, %c0_86] : memref<2x3x5x16x128xf32, #tpu.memory_space<vmem>>, vector<1x1x1x16x128xf32>
    %287 = vector.shape_cast %286 : vector<1x1x1x16x128xf32> to vector<16x128xf32>
    %c15 = arith.constant 15 : index
    %288 = memref.load %arg1[%c15] : memref<120xf32, #tpu.memory_space<smem>>
    %289 = vector.broadcast %288 : f32 to vector<16x128xf32>
    %290 = arith.mulf %289, %287 : vector<16x128xf32>
    %291 = arith.addf %273, %290 : vector<16x128xf32>
    %c45 = arith.constant 45 : index
    %292 = memref.load %arg1[%c45] : memref<120xf32, #tpu.memory_space<smem>>
    %293 = vector.broadcast %292 : f32 to vector<16x128xf32>
    %294 = arith.mulf %293, %287 : vector<16x128xf32>
    %295 = arith.addf %277, %294 : vector<16x128xf32>
    %c75 = arith.constant 75 : index
    %296 = memref.load %arg1[%c75] : memref<120xf32, #tpu.memory_space<smem>>
    %297 = vector.broadcast %296 : f32 to vector<16x128xf32>
    %298 = arith.mulf %297, %287 : vector<16x128xf32>
    %299 = arith.addf %281, %298 : vector<16x128xf32>
    %c105 = arith.constant 105 : index
    %300 = memref.load %arg1[%c105] : memref<120xf32, #tpu.memory_space<smem>>
    %301 = vector.broadcast %300 : f32 to vector<16x128xf32>
    %302 = arith.mulf %301, %287 : vector<16x128xf32>
    %303 = arith.addf %285, %302 : vector<16x128xf32>
    %c1_87 = arith.constant 1 : index
    %c0_88 = arith.constant 0 : index
    %c1_89 = arith.constant 1 : index
    %c0_90 = arith.constant 0 : index
    %c0_91 = arith.constant 0 : index
    %304 = vector.load %arg0[%c1_87, %c0_88, %c1_89, %c0_90, %c0_91] : memref<2x3x5x16x128xf32, #tpu.memory_space<vmem>>, vector<1x1x1x16x128xf32>
    %305 = vector.shape_cast %304 : vector<1x1x1x16x128xf32> to vector<16x128xf32>
    %c16 = arith.constant 16 : index
    %306 = memref.load %arg1[%c16] : memref<120xf32, #tpu.memory_space<smem>>
    %307 = vector.broadcast %306 : f32 to vector<16x128xf32>
    %308 = arith.mulf %307, %305 : vector<16x128xf32>
    %309 = arith.addf %291, %308 : vector<16x128xf32>
    %c46 = arith.constant 46 : index
    %310 = memref.load %arg1[%c46] : memref<120xf32, #tpu.memory_space<smem>>
    %311 = vector.broadcast %310 : f32 to vector<16x128xf32>
    %312 = arith.mulf %311, %305 : vector<16x128xf32>
    %313 = arith.addf %295, %312 : vector<16x128xf32>
    %c76 = arith.constant 76 : index
    %314 = memref.load %arg1[%c76] : memref<120xf32, #tpu.memory_space<smem>>
    %315 = vector.broadcast %314 : f32 to vector<16x128xf32>
    %316 = arith.mulf %315, %305 : vector<16x128xf32>
    %317 = arith.addf %299, %316 : vector<16x128xf32>
    %c106 = arith.constant 106 : index
    %318 = memref.load %arg1[%c106] : memref<120xf32, #tpu.memory_space<smem>>
    %319 = vector.broadcast %318 : f32 to vector<16x128xf32>
    %320 = arith.mulf %319, %305 : vector<16x128xf32>
    %321 = arith.addf %303, %320 : vector<16x128xf32>
    %c1_92 = arith.constant 1 : index
    %c0_93 = arith.constant 0 : index
    %c2_94 = arith.constant 2 : index
    %c0_95 = arith.constant 0 : index
    %c0_96 = arith.constant 0 : index
    %322 = vector.load %arg0[%c1_92, %c0_93, %c2_94, %c0_95, %c0_96] : memref<2x3x5x16x128xf32, #tpu.memory_space<vmem>>, vector<1x1x1x16x128xf32>
    %323 = vector.shape_cast %322 : vector<1x1x1x16x128xf32> to vector<16x128xf32>
    %c17 = arith.constant 17 : index
    %324 = memref.load %arg1[%c17] : memref<120xf32, #tpu.memory_space<smem>>
    %325 = vector.broadcast %324 : f32 to vector<16x128xf32>
    %326 = arith.mulf %325, %323 : vector<16x128xf32>
    %327 = arith.addf %309, %326 : vector<16x128xf32>
    %c47 = arith.constant 47 : index
    %328 = memref.load %arg1[%c47] : memref<120xf32, #tpu.memory_space<smem>>
    %329 = vector.broadcast %328 : f32 to vector<16x128xf32>
    %330 = arith.mulf %329, %323 : vector<16x128xf32>
    %331 = arith.addf %313, %330 : vector<16x128xf32>
    %c77 = arith.constant 77 : index
    %332 = memref.load %arg1[%c77] : memref<120xf32, #tpu.memory_space<smem>>
    %333 = vector.broadcast %332 : f32 to vector<16x128xf32>
    %334 = arith.mulf %333, %323 : vector<16x128xf32>
    %335 = arith.addf %317, %334 : vector<16x128xf32>
    %c107 = arith.constant 107 : index
    %336 = memref.load %arg1[%c107] : memref<120xf32, #tpu.memory_space<smem>>
    %337 = vector.broadcast %336 : f32 to vector<16x128xf32>
    %338 = arith.mulf %337, %323 : vector<16x128xf32>
    %339 = arith.addf %321, %338 : vector<16x128xf32>
    %c1_97 = arith.constant 1 : index
    %c0_98 = arith.constant 0 : index
    %c3_99 = arith.constant 3 : index
    %c0_100 = arith.constant 0 : index
    %c0_101 = arith.constant 0 : index
    %340 = vector.load %arg0[%c1_97, %c0_98, %c3_99, %c0_100, %c0_101] : memref<2x3x5x16x128xf32, #tpu.memory_space<vmem>>, vector<1x1x1x16x128xf32>
    %341 = vector.shape_cast %340 : vector<1x1x1x16x128xf32> to vector<16x128xf32>
    %c18 = arith.constant 18 : index
    %342 = memref.load %arg1[%c18] : memref<120xf32, #tpu.memory_space<smem>>
    %343 = vector.broadcast %342 : f32 to vector<16x128xf32>
    %344 = arith.mulf %343, %341 : vector<16x128xf32>
    %345 = arith.addf %327, %344 : vector<16x128xf32>
    %c48 = arith.constant 48 : index
    %346 = memref.load %arg1[%c48] : memref<120xf32, #tpu.memory_space<smem>>
    %347 = vector.broadcast %346 : f32 to vector<16x128xf32>
    %348 = arith.mulf %347, %341 : vector<16x128xf32>
    %349 = arith.addf %331, %348 : vector<16x128xf32>
    %c78 = arith.constant 78 : index
    %350 = memref.load %arg1[%c78] : memref<120xf32, #tpu.memory_space<smem>>
    %351 = vector.broadcast %350 : f32 to vector<16x128xf32>
    %352 = arith.mulf %351, %341 : vector<16x128xf32>
    %353 = arith.addf %335, %352 : vector<16x128xf32>
    %c108 = arith.constant 108 : index
    %354 = memref.load %arg1[%c108] : memref<120xf32, #tpu.memory_space<smem>>
    %355 = vector.broadcast %354 : f32 to vector<16x128xf32>
    %356 = arith.mulf %355, %341 : vector<16x128xf32>
    %357 = arith.addf %339, %356 : vector<16x128xf32>
    %c1_102 = arith.constant 1 : index
    %c0_103 = arith.constant 0 : index
    %c4_104 = arith.constant 4 : index
    %c0_105 = arith.constant 0 : index
    %c0_106 = arith.constant 0 : index
    %358 = vector.load %arg0[%c1_102, %c0_103, %c4_104, %c0_105, %c0_106] : memref<2x3x5x16x128xf32, #tpu.memory_space<vmem>>, vector<1x1x1x16x128xf32>
    %359 = vector.shape_cast %358 : vector<1x1x1x16x128xf32> to vector<16x128xf32>
    %c19 = arith.constant 19 : index
    %360 = memref.load %arg1[%c19] : memref<120xf32, #tpu.memory_space<smem>>
    %361 = vector.broadcast %360 : f32 to vector<16x128xf32>
    %362 = arith.mulf %361, %359 : vector<16x128xf32>
    %363 = arith.addf %345, %362 : vector<16x128xf32>
    %c49 = arith.constant 49 : index
    %364 = memref.load %arg1[%c49] : memref<120xf32, #tpu.memory_space<smem>>
    %365 = vector.broadcast %364 : f32 to vector<16x128xf32>
    %366 = arith.mulf %365, %359 : vector<16x128xf32>
    %367 = arith.addf %349, %366 : vector<16x128xf32>
    %c79 = arith.constant 79 : index
    %368 = memref.load %arg1[%c79] : memref<120xf32, #tpu.memory_space<smem>>
    %369 = vector.broadcast %368 : f32 to vector<16x128xf32>
    %370 = arith.mulf %369, %359 : vector<16x128xf32>
    %371 = arith.addf %353, %370 : vector<16x128xf32>
    %c109 = arith.constant 109 : index
    %372 = memref.load %arg1[%c109] : memref<120xf32, #tpu.memory_space<smem>>
    %373 = vector.broadcast %372 : f32 to vector<16x128xf32>
    %374 = arith.mulf %373, %359 : vector<16x128xf32>
    %375 = arith.addf %357, %374 : vector<16x128xf32>
    %c1_107 = arith.constant 1 : index
    %c1_108 = arith.constant 1 : index
    %c0_109 = arith.constant 0 : index
    %c0_110 = arith.constant 0 : index
    %c0_111 = arith.constant 0 : index
    %376 = vector.load %arg0[%c1_107, %c1_108, %c0_109, %c0_110, %c0_111] : memref<2x3x5x16x128xf32, #tpu.memory_space<vmem>>, vector<1x1x1x16x128xf32>
    %377 = vector.shape_cast %376 : vector<1x1x1x16x128xf32> to vector<16x128xf32>
    %c20 = arith.constant 20 : index
    %378 = memref.load %arg1[%c20] : memref<120xf32, #tpu.memory_space<smem>>
    %379 = vector.broadcast %378 : f32 to vector<16x128xf32>
    %380 = arith.mulf %379, %377 : vector<16x128xf32>
    %381 = arith.addf %363, %380 : vector<16x128xf32>
    %c50 = arith.constant 50 : index
    %382 = memref.load %arg1[%c50] : memref<120xf32, #tpu.memory_space<smem>>
    %383 = vector.broadcast %382 : f32 to vector<16x128xf32>
    %384 = arith.mulf %383, %377 : vector<16x128xf32>
    %385 = arith.addf %367, %384 : vector<16x128xf32>
    %c80 = arith.constant 80 : index
    %386 = memref.load %arg1[%c80] : memref<120xf32, #tpu.memory_space<smem>>
    %387 = vector.broadcast %386 : f32 to vector<16x128xf32>
    %388 = arith.mulf %387, %377 : vector<16x128xf32>
    %389 = arith.addf %371, %388 : vector<16x128xf32>
    %c110 = arith.constant 110 : index
    %390 = memref.load %arg1[%c110] : memref<120xf32, #tpu.memory_space<smem>>
    %391 = vector.broadcast %390 : f32 to vector<16x128xf32>
    %392 = arith.mulf %391, %377 : vector<16x128xf32>
    %393 = arith.addf %375, %392 : vector<16x128xf32>
    %c1_112 = arith.constant 1 : index
    %c1_113 = arith.constant 1 : index
    %c1_114 = arith.constant 1 : index
    %c0_115 = arith.constant 0 : index
    %c0_116 = arith.constant 0 : index
    %394 = vector.load %arg0[%c1_112, %c1_113, %c1_114, %c0_115, %c0_116] : memref<2x3x5x16x128xf32, #tpu.memory_space<vmem>>, vector<1x1x1x16x128xf32>
    %395 = vector.shape_cast %394 : vector<1x1x1x16x128xf32> to vector<16x128xf32>
    %c21 = arith.constant 21 : index
    %396 = memref.load %arg1[%c21] : memref<120xf32, #tpu.memory_space<smem>>
    %397 = vector.broadcast %396 : f32 to vector<16x128xf32>
    %398 = arith.mulf %397, %395 : vector<16x128xf32>
    %399 = arith.addf %381, %398 : vector<16x128xf32>
    %c51 = arith.constant 51 : index
    %400 = memref.load %arg1[%c51] : memref<120xf32, #tpu.memory_space<smem>>
    %401 = vector.broadcast %400 : f32 to vector<16x128xf32>
    %402 = arith.mulf %401, %395 : vector<16x128xf32>
    %403 = arith.addf %385, %402 : vector<16x128xf32>
    %c81 = arith.constant 81 : index
    %404 = memref.load %arg1[%c81] : memref<120xf32, #tpu.memory_space<smem>>
    %405 = vector.broadcast %404 : f32 to vector<16x128xf32>
    %406 = arith.mulf %405, %395 : vector<16x128xf32>
    %407 = arith.addf %389, %406 : vector<16x128xf32>
    %c111 = arith.constant 111 : index
    %408 = memref.load %arg1[%c111] : memref<120xf32, #tpu.memory_space<smem>>
    %409 = vector.broadcast %408 : f32 to vector<16x128xf32>
    %410 = arith.mulf %409, %395 : vector<16x128xf32>
    %411 = arith.addf %393, %410 : vector<16x128xf32>
    %c1_117 = arith.constant 1 : index
    %c1_118 = arith.constant 1 : index
    %c2_119 = arith.constant 2 : index
    %c0_120 = arith.constant 0 : index
    %c0_121 = arith.constant 0 : index
    %412 = vector.load %arg0[%c1_117, %c1_118, %c2_119, %c0_120, %c0_121] : memref<2x3x5x16x128xf32, #tpu.memory_space<vmem>>, vector<1x1x1x16x128xf32>
    %413 = vector.shape_cast %412 : vector<1x1x1x16x128xf32> to vector<16x128xf32>
    %c22 = arith.constant 22 : index
    %414 = memref.load %arg1[%c22] : memref<120xf32, #tpu.memory_space<smem>>
    %415 = vector.broadcast %414 : f32 to vector<16x128xf32>
    %416 = arith.mulf %415, %413 : vector<16x128xf32>
    %417 = arith.addf %399, %416 : vector<16x128xf32>
    %c52 = arith.constant 52 : index
    %418 = memref.load %arg1[%c52] : memref<120xf32, #tpu.memory_space<smem>>
    %419 = vector.broadcast %418 : f32 to vector<16x128xf32>
    %420 = arith.mulf %419, %413 : vector<16x128xf32>
    %421 = arith.addf %403, %420 : vector<16x128xf32>
    %c82 = arith.constant 82 : index
    %422 = memref.load %arg1[%c82] : memref<120xf32, #tpu.memory_space<smem>>
    %423 = vector.broadcast %422 : f32 to vector<16x128xf32>
    %424 = arith.mulf %423, %413 : vector<16x128xf32>
    %425 = arith.addf %407, %424 : vector<16x128xf32>
    %c112 = arith.constant 112 : index
    %426 = memref.load %arg1[%c112] : memref<120xf32, #tpu.memory_space<smem>>
    %427 = vector.broadcast %426 : f32 to vector<16x128xf32>
    %428 = arith.mulf %427, %413 : vector<16x128xf32>
    %429 = arith.addf %411, %428 : vector<16x128xf32>
    %c1_122 = arith.constant 1 : index
    %c1_123 = arith.constant 1 : index
    %c3_124 = arith.constant 3 : index
    %c0_125 = arith.constant 0 : index
    %c0_126 = arith.constant 0 : index
    %430 = vector.load %arg0[%c1_122, %c1_123, %c3_124, %c0_125, %c0_126] : memref<2x3x5x16x128xf32, #tpu.memory_space<vmem>>, vector<1x1x1x16x128xf32>
    %431 = vector.shape_cast %430 : vector<1x1x1x16x128xf32> to vector<16x128xf32>
    %c23 = arith.constant 23 : index
    %432 = memref.load %arg1[%c23] : memref<120xf32, #tpu.memory_space<smem>>
    %433 = vector.broadcast %432 : f32 to vector<16x128xf32>
    %434 = arith.mulf %433, %431 : vector<16x128xf32>
    %435 = arith.addf %417, %434 : vector<16x128xf32>
    %c53 = arith.constant 53 : index
    %436 = memref.load %arg1[%c53] : memref<120xf32, #tpu.memory_space<smem>>
    %437 = vector.broadcast %436 : f32 to vector<16x128xf32>
    %438 = arith.mulf %437, %431 : vector<16x128xf32>
    %439 = arith.addf %421, %438 : vector<16x128xf32>
    %c83 = arith.constant 83 : index
    %440 = memref.load %arg1[%c83] : memref<120xf32, #tpu.memory_space<smem>>
    %441 = vector.broadcast %440 : f32 to vector<16x128xf32>
    %442 = arith.mulf %441, %431 : vector<16x128xf32>
    %443 = arith.addf %425, %442 : vector<16x128xf32>
    %c113 = arith.constant 113 : index
    %444 = memref.load %arg1[%c113] : memref<120xf32, #tpu.memory_space<smem>>
    %445 = vector.broadcast %444 : f32 to vector<16x128xf32>
    %446 = arith.mulf %445, %431 : vector<16x128xf32>
    %447 = arith.addf %429, %446 : vector<16x128xf32>
    %c1_127 = arith.constant 1 : index
    %c1_128 = arith.constant 1 : index
    %c4_129 = arith.constant 4 : index
    %c0_130 = arith.constant 0 : index
    %c0_131 = arith.constant 0 : index
    %448 = vector.load %arg0[%c1_127, %c1_128, %c4_129, %c0_130, %c0_131] : memref<2x3x5x16x128xf32, #tpu.memory_space<vmem>>, vector<1x1x1x16x128xf32>
    %449 = vector.shape_cast %448 : vector<1x1x1x16x128xf32> to vector<16x128xf32>
    %c24 = arith.constant 24 : index
    %450 = memref.load %arg1[%c24] : memref<120xf32, #tpu.memory_space<smem>>
    %451 = vector.broadcast %450 : f32 to vector<16x128xf32>
    %452 = arith.mulf %451, %449 : vector<16x128xf32>
    %453 = arith.addf %435, %452 : vector<16x128xf32>
    %c54 = arith.constant 54 : index
    %454 = memref.load %arg1[%c54] : memref<120xf32, #tpu.memory_space<smem>>
    %455 = vector.broadcast %454 : f32 to vector<16x128xf32>
    %456 = arith.mulf %455, %449 : vector<16x128xf32>
    %457 = arith.addf %439, %456 : vector<16x128xf32>
    %c84 = arith.constant 84 : index
    %458 = memref.load %arg1[%c84] : memref<120xf32, #tpu.memory_space<smem>>
    %459 = vector.broadcast %458 : f32 to vector<16x128xf32>
    %460 = arith.mulf %459, %449 : vector<16x128xf32>
    %461 = arith.addf %443, %460 : vector<16x128xf32>
    %c114 = arith.constant 114 : index
    %462 = memref.load %arg1[%c114] : memref<120xf32, #tpu.memory_space<smem>>
    %463 = vector.broadcast %462 : f32 to vector<16x128xf32>
    %464 = arith.mulf %463, %449 : vector<16x128xf32>
    %465 = arith.addf %447, %464 : vector<16x128xf32>
    %c1_132 = arith.constant 1 : index
    %c2_133 = arith.constant 2 : index
    %c0_134 = arith.constant 0 : index
    %c0_135 = arith.constant 0 : index
    %c0_136 = arith.constant 0 : index
    %466 = vector.load %arg0[%c1_132, %c2_133, %c0_134, %c0_135, %c0_136] : memref<2x3x5x16x128xf32, #tpu.memory_space<vmem>>, vector<1x1x1x16x128xf32>
    %467 = vector.shape_cast %466 : vector<1x1x1x16x128xf32> to vector<16x128xf32>
    %c25 = arith.constant 25 : index
    %468 = memref.load %arg1[%c25] : memref<120xf32, #tpu.memory_space<smem>>
    %469 = vector.broadcast %468 : f32 to vector<16x128xf32>
    %470 = arith.mulf %469, %467 : vector<16x128xf32>
    %471 = arith.addf %453, %470 : vector<16x128xf32>
    %c55 = arith.constant 55 : index
    %472 = memref.load %arg1[%c55] : memref<120xf32, #tpu.memory_space<smem>>
    %473 = vector.broadcast %472 : f32 to vector<16x128xf32>
    %474 = arith.mulf %473, %467 : vector<16x128xf32>
    %475 = arith.addf %457, %474 : vector<16x128xf32>
    %c85 = arith.constant 85 : index
    %476 = memref.load %arg1[%c85] : memref<120xf32, #tpu.memory_space<smem>>
    %477 = vector.broadcast %476 : f32 to vector<16x128xf32>
    %478 = arith.mulf %477, %467 : vector<16x128xf32>
    %479 = arith.addf %461, %478 : vector<16x128xf32>
    %c115 = arith.constant 115 : index
    %480 = memref.load %arg1[%c115] : memref<120xf32, #tpu.memory_space<smem>>
    %481 = vector.broadcast %480 : f32 to vector<16x128xf32>
    %482 = arith.mulf %481, %467 : vector<16x128xf32>
    %483 = arith.addf %465, %482 : vector<16x128xf32>
    %c1_137 = arith.constant 1 : index
    %c2_138 = arith.constant 2 : index
    %c1_139 = arith.constant 1 : index
    %c0_140 = arith.constant 0 : index
    %c0_141 = arith.constant 0 : index
    %484 = vector.load %arg0[%c1_137, %c2_138, %c1_139, %c0_140, %c0_141] : memref<2x3x5x16x128xf32, #tpu.memory_space<vmem>>, vector<1x1x1x16x128xf32>
    %485 = vector.shape_cast %484 : vector<1x1x1x16x128xf32> to vector<16x128xf32>
    %c26 = arith.constant 26 : index
    %486 = memref.load %arg1[%c26] : memref<120xf32, #tpu.memory_space<smem>>
    %487 = vector.broadcast %486 : f32 to vector<16x128xf32>
    %488 = arith.mulf %487, %485 : vector<16x128xf32>
    %489 = arith.addf %471, %488 : vector<16x128xf32>
    %c56 = arith.constant 56 : index
    %490 = memref.load %arg1[%c56] : memref<120xf32, #tpu.memory_space<smem>>
    %491 = vector.broadcast %490 : f32 to vector<16x128xf32>
    %492 = arith.mulf %491, %485 : vector<16x128xf32>
    %493 = arith.addf %475, %492 : vector<16x128xf32>
    %c86 = arith.constant 86 : index
    %494 = memref.load %arg1[%c86] : memref<120xf32, #tpu.memory_space<smem>>
    %495 = vector.broadcast %494 : f32 to vector<16x128xf32>
    %496 = arith.mulf %495, %485 : vector<16x128xf32>
    %497 = arith.addf %479, %496 : vector<16x128xf32>
    %c116 = arith.constant 116 : index
    %498 = memref.load %arg1[%c116] : memref<120xf32, #tpu.memory_space<smem>>
    %499 = vector.broadcast %498 : f32 to vector<16x128xf32>
    %500 = arith.mulf %499, %485 : vector<16x128xf32>
    %501 = arith.addf %483, %500 : vector<16x128xf32>
    %c1_142 = arith.constant 1 : index
    %c2_143 = arith.constant 2 : index
    %c2_144 = arith.constant 2 : index
    %c0_145 = arith.constant 0 : index
    %c0_146 = arith.constant 0 : index
    %502 = vector.load %arg0[%c1_142, %c2_143, %c2_144, %c0_145, %c0_146] : memref<2x3x5x16x128xf32, #tpu.memory_space<vmem>>, vector<1x1x1x16x128xf32>
    %503 = vector.shape_cast %502 : vector<1x1x1x16x128xf32> to vector<16x128xf32>
    %c27 = arith.constant 27 : index
    %504 = memref.load %arg1[%c27] : memref<120xf32, #tpu.memory_space<smem>>
    %505 = vector.broadcast %504 : f32 to vector<16x128xf32>
    %506 = arith.mulf %505, %503 : vector<16x128xf32>
    %507 = arith.addf %489, %506 : vector<16x128xf32>
    %c57 = arith.constant 57 : index
    %508 = memref.load %arg1[%c57] : memref<120xf32, #tpu.memory_space<smem>>
    %509 = vector.broadcast %508 : f32 to vector<16x128xf32>
    %510 = arith.mulf %509, %503 : vector<16x128xf32>
    %511 = arith.addf %493, %510 : vector<16x128xf32>
    %c87 = arith.constant 87 : index
    %512 = memref.load %arg1[%c87] : memref<120xf32, #tpu.memory_space<smem>>
    %513 = vector.broadcast %512 : f32 to vector<16x128xf32>
    %514 = arith.mulf %513, %503 : vector<16x128xf32>
    %515 = arith.addf %497, %514 : vector<16x128xf32>
    %c117 = arith.constant 117 : index
    %516 = memref.load %arg1[%c117] : memref<120xf32, #tpu.memory_space<smem>>
    %517 = vector.broadcast %516 : f32 to vector<16x128xf32>
    %518 = arith.mulf %517, %503 : vector<16x128xf32>
    %519 = arith.addf %501, %518 : vector<16x128xf32>
    %c1_147 = arith.constant 1 : index
    %c2_148 = arith.constant 2 : index
    %c3_149 = arith.constant 3 : index
    %c0_150 = arith.constant 0 : index
    %c0_151 = arith.constant 0 : index
    %520 = vector.load %arg0[%c1_147, %c2_148, %c3_149, %c0_150, %c0_151] : memref<2x3x5x16x128xf32, #tpu.memory_space<vmem>>, vector<1x1x1x16x128xf32>
    %521 = vector.shape_cast %520 : vector<1x1x1x16x128xf32> to vector<16x128xf32>
    %c28 = arith.constant 28 : index
    %522 = memref.load %arg1[%c28] : memref<120xf32, #tpu.memory_space<smem>>
    %523 = vector.broadcast %522 : f32 to vector<16x128xf32>
    %524 = arith.mulf %523, %521 : vector<16x128xf32>
    %525 = arith.addf %507, %524 : vector<16x128xf32>
    %c58 = arith.constant 58 : index
    %526 = memref.load %arg1[%c58] : memref<120xf32, #tpu.memory_space<smem>>
    %527 = vector.broadcast %526 : f32 to vector<16x128xf32>
    %528 = arith.mulf %527, %521 : vector<16x128xf32>
    %529 = arith.addf %511, %528 : vector<16x128xf32>
    %c88 = arith.constant 88 : index
    %530 = memref.load %arg1[%c88] : memref<120xf32, #tpu.memory_space<smem>>
    %531 = vector.broadcast %530 : f32 to vector<16x128xf32>
    %532 = arith.mulf %531, %521 : vector<16x128xf32>
    %533 = arith.addf %515, %532 : vector<16x128xf32>
    %c118 = arith.constant 118 : index
    %534 = memref.load %arg1[%c118] : memref<120xf32, #tpu.memory_space<smem>>
    %535 = vector.broadcast %534 : f32 to vector<16x128xf32>
    %536 = arith.mulf %535, %521 : vector<16x128xf32>
    %537 = arith.addf %519, %536 : vector<16x128xf32>
    %c1_152 = arith.constant 1 : index
    %c2_153 = arith.constant 2 : index
    %c4_154 = arith.constant 4 : index
    %c0_155 = arith.constant 0 : index
    %c0_156 = arith.constant 0 : index
    %538 = vector.load %arg0[%c1_152, %c2_153, %c4_154, %c0_155, %c0_156] : memref<2x3x5x16x128xf32, #tpu.memory_space<vmem>>, vector<1x1x1x16x128xf32>
    %539 = vector.shape_cast %538 : vector<1x1x1x16x128xf32> to vector<16x128xf32>
    %c29 = arith.constant 29 : index
    %540 = memref.load %arg1[%c29] : memref<120xf32, #tpu.memory_space<smem>>
    %541 = vector.broadcast %540 : f32 to vector<16x128xf32>
    %542 = arith.mulf %541, %539 : vector<16x128xf32>
    %543 = arith.addf %525, %542 : vector<16x128xf32>
    %c59 = arith.constant 59 : index
    %544 = memref.load %arg1[%c59] : memref<120xf32, #tpu.memory_space<smem>>
    %545 = vector.broadcast %544 : f32 to vector<16x128xf32>
    %546 = arith.mulf %545, %539 : vector<16x128xf32>
    %547 = arith.addf %529, %546 : vector<16x128xf32>
    %c89 = arith.constant 89 : index
    %548 = memref.load %arg1[%c89] : memref<120xf32, #tpu.memory_space<smem>>
    %549 = vector.broadcast %548 : f32 to vector<16x128xf32>
    %550 = arith.mulf %549, %539 : vector<16x128xf32>
    %551 = arith.addf %533, %550 : vector<16x128xf32>
    %c119 = arith.constant 119 : index
    %552 = memref.load %arg1[%c119] : memref<120xf32, #tpu.memory_space<smem>>
    %553 = vector.broadcast %552 : f32 to vector<16x128xf32>
    %554 = arith.mulf %553, %539 : vector<16x128xf32>
    %555 = arith.addf %537, %554 : vector<16x128xf32>
    %c0_157 = arith.constant 0 : index
    %c0_158 = arith.constant 0 : index
    %556 = vector.load %arg4[%c0_157, %c0_158] : memref<1x128xf32, #tpu.memory_space<vmem>>, vector<1x128xf32>
    %cst_159 = arith.constant 0.00999999977 : f32
    %557 = vector.broadcast %cst_159 : f32 to vector<16x128xf32>
    %558 = arith.mulf %557, %543 : vector<16x128xf32>
    %559 = arith.maximumf %543, %558 : vector<16x128xf32>
    %560 = vector.extract_strided_slice %559 {offsets = [0, 0], sizes = [16, 60], strides = [1, 1]} : vector<16x128xf32> to vector<16x60xf32>
    %561 = vector.extract_strided_slice %559 {offsets = [0, 64], sizes = [16, 60], strides = [1, 1]} : vector<16x128xf32> to vector<16x60xf32>
    %562 = tpu.concatenate %560, %561 in 0 : vector<16x60xf32>, vector<16x60xf32> -> vector<32x60xf32>
    %c0_160 = arith.constant 0 : index
    %c0_161 = arith.constant 0 : index
    %c0_162 = arith.constant 0 : index
    %563 = vector.load %arg3[%c0_160, %c0_161, %c0_162] : memref<4x60x128xf32, #tpu.memory_space<vmem>>, vector<1x60x128xf32>
    %564 = vector.shape_cast %563 : vector<1x60x128xf32> to vector<60x128xf32>
    %cst_163 = arith.constant dense<0.000000e+00> : vector<32x128xf32>
    %565 = tpu.matmul %562, %564, %cst_163 {dimension_numbers = #tpu.dot_dimension_numbers<[1], [0], [0], [1], [0, 0, 1, 1], [], []>} : vector<32x60xf32>, vector<60x128xf32>, vector<32x128xf32> -> vector<32x128xf32>
    %566 = vector.broadcast %556 : vector<1x128xf32> to vector<32x128xf32>
    %567 = arith.addf %566, %565 : vector<32x128xf32>
    %cst_164 = arith.constant 0.00999999977 : f32
    %568 = vector.broadcast %cst_164 : f32 to vector<16x128xf32>
    %569 = arith.mulf %568, %547 : vector<16x128xf32>
    %570 = arith.maximumf %547, %569 : vector<16x128xf32>
    %571 = vector.extract_strided_slice %570 {offsets = [0, 0], sizes = [16, 60], strides = [1, 1]} : vector<16x128xf32> to vector<16x60xf32>
    %572 = vector.extract_strided_slice %570 {offsets = [0, 64], sizes = [16, 60], strides = [1, 1]} : vector<16x128xf32> to vector<16x60xf32>
    %573 = tpu.concatenate %571, %572 in 0 : vector<16x60xf32>, vector<16x60xf32> -> vector<32x60xf32>
    %c1_165 = arith.constant 1 : index
    %c0_166 = arith.constant 0 : index
    %c0_167 = arith.constant 0 : index
    %574 = vector.load %arg3[%c1_165, %c0_166, %c0_167] : memref<4x60x128xf32, #tpu.memory_space<vmem>>, vector<1x60x128xf32>
    %575 = vector.shape_cast %574 : vector<1x60x128xf32> to vector<60x128xf32>
    %cst_168 = arith.constant dense<0.000000e+00> : vector<32x128xf32>
    %576 = tpu.matmul %573, %575, %cst_168 {dimension_numbers = #tpu.dot_dimension_numbers<[1], [0], [0], [1], [0, 0, 1, 1], [], []>} : vector<32x60xf32>, vector<60x128xf32>, vector<32x128xf32> -> vector<32x128xf32>
    %577 = arith.addf %567, %576 : vector<32x128xf32>
    %cst_169 = arith.constant 0.00999999977 : f32
    %578 = vector.broadcast %cst_169 : f32 to vector<16x128xf32>
    %579 = arith.mulf %578, %551 : vector<16x128xf32>
    %580 = arith.maximumf %551, %579 : vector<16x128xf32>
    %581 = vector.extract_strided_slice %580 {offsets = [0, 0], sizes = [16, 60], strides = [1, 1]} : vector<16x128xf32> to vector<16x60xf32>
    %582 = vector.extract_strided_slice %580 {offsets = [0, 64], sizes = [16, 60], strides = [1, 1]} : vector<16x128xf32> to vector<16x60xf32>
    %583 = tpu.concatenate %581, %582 in 0 : vector<16x60xf32>, vector<16x60xf32> -> vector<32x60xf32>
    %c2_170 = arith.constant 2 : index
    %c0_171 = arith.constant 0 : index
    %c0_172 = arith.constant 0 : index
    %584 = vector.load %arg3[%c2_170, %c0_171, %c0_172] : memref<4x60x128xf32, #tpu.memory_space<vmem>>, vector<1x60x128xf32>
    %585 = vector.shape_cast %584 : vector<1x60x128xf32> to vector<60x128xf32>
    %cst_173 = arith.constant dense<0.000000e+00> : vector<32x128xf32>
    %586 = tpu.matmul %583, %585, %cst_173 {dimension_numbers = #tpu.dot_dimension_numbers<[1], [0], [0], [1], [0, 0, 1, 1], [], []>} : vector<32x60xf32>, vector<60x128xf32>, vector<32x128xf32> -> vector<32x128xf32>
    %587 = arith.addf %577, %586 : vector<32x128xf32>
    %cst_174 = arith.constant 0.00999999977 : f32
    %588 = vector.broadcast %cst_174 : f32 to vector<16x128xf32>
    %589 = arith.mulf %588, %555 : vector<16x128xf32>
    %590 = arith.maximumf %555, %589 : vector<16x128xf32>
    %591 = vector.extract_strided_slice %590 {offsets = [0, 0], sizes = [16, 60], strides = [1, 1]} : vector<16x128xf32> to vector<16x60xf32>
    %592 = vector.extract_strided_slice %590 {offsets = [0, 64], sizes = [16, 60], strides = [1, 1]} : vector<16x128xf32> to vector<16x60xf32>
    %593 = tpu.concatenate %591, %592 in 0 : vector<16x60xf32>, vector<16x60xf32> -> vector<32x60xf32>
    %c3_175 = arith.constant 3 : index
    %c0_176 = arith.constant 0 : index
    %c0_177 = arith.constant 0 : index
    %594 = vector.load %arg3[%c3_175, %c0_176, %c0_177] : memref<4x60x128xf32, #tpu.memory_space<vmem>>, vector<1x60x128xf32>
    %595 = vector.shape_cast %594 : vector<1x60x128xf32> to vector<60x128xf32>
    %cst_178 = arith.constant dense<0.000000e+00> : vector<32x128xf32>
    %596 = tpu.matmul %593, %595, %cst_178 {dimension_numbers = #tpu.dot_dimension_numbers<[1], [0], [0], [1], [0, 0, 1, 1], [], []>} : vector<32x60xf32>, vector<60x128xf32>, vector<32x128xf32> -> vector<32x128xf32>
    %597 = arith.addf %587, %596 : vector<32x128xf32>
    %cst_179 = arith.constant 0.00999999977 : f32
    %598 = vector.broadcast %cst_179 : f32 to vector<32x128xf32>
    %599 = arith.mulf %598, %597 : vector<32x128xf32>
    %600 = arith.maximumf %597, %599 : vector<32x128xf32>
    %c0_180 = arith.constant 0 : index
    %c0_181 = arith.constant 0 : index
    %601 = vector.load %arg5[%c0_180, %c0_181] : memref<1x128xf32, #tpu.memory_space<vmem>>, vector<1x128xf32>
    %602 = vector.broadcast %601 : vector<1x128xf32> to vector<32x128xf32>
    %603 = arith.mulf %600, %602 : vector<32x128xf32>
    %cst_182 = arith.constant dense<0.000000e+00> : vector<32xf32>
    %604 = vector.multi_reduction <add>, %603, %cst_182 [1] : vector<32x128xf32> to vector<32xf32>
    %605 = vector.shape_cast %604 : vector<32xf32> to vector<32x1xf32>
    %c0_183 = arith.constant 0 : index
    %606 = memref.load %arg6[%c0_183] : memref<1xf32, #tpu.memory_space<smem>>
    %607 = vector.broadcast %606 : f32 to vector<32x1xf32>
    %608 = arith.addf %605, %607 : vector<32x1xf32>
    %c0_184 = arith.constant 0 : index
    %c0_185 = arith.constant 0 : index
    %609 = vector.load %arg7[%c0_184, %c0_185] : memref<32x1xf32, #tpu.memory_space<vmem>>, vector<32x1xf32>
    tpu.vector_store %arg7[%c0_184, %c0_185], %608 {strides = array<i32>} : memref<32x1xf32, #tpu.memory_space<vmem>>, vector<32x1xf32>,
    return
  }
}

</mosaic_0001>

<llo_original>
// kernel: cnn2_forward.1
$region0: #{cnn2_forward.1}
  #allocation0 [shape = 'u32[]', space=smem, size = 0x4, offset = 0x4, fixed_abs, tag = 'smem constant byte address 0x4 - core index']
  #allocation1 [shape = 'u32[144,128]{1,0:T(1,128)}', space=vmem, size = 0x12000, scoped, tag = 'internal scratch']
  #allocation2 [shape = 'f32[1]{0:T(128)S(6)}', space=smem, size = 0x200, scoped, tag = 'scoped memory for cnn2_forward.1']
  %s0 = inlined_call_operand.vmem [shape: f32[2,3,5,16,128], index: 0, kind: input, shape index: {}]
  %s1 = inlined_call_operand.vmem [shape: f32[120], index: 1, kind: input, shape index: {}]
  %s2 = inlined_call_operand.vmem [shape: f32[4], index: 2, kind: input, shape index: {}]
  %s3 = inlined_call_operand.vmem [shape: f32[4,60,128], index: 3, kind: input, shape index: {}]
  %s4 = inlined_call_operand.vmem [shape: f32[1,128], index: 4, kind: input, shape index: {}]
  %s5 = inlined_call_operand.vmem [shape: f32[1,128], index: 5, kind: input, shape index: {}]
  %s6 = inlined_call_operand.<no memory space> [shape: f32[1], index: 6, kind: input, shape index: {}]
  %s7 = inlined_call_operand.vmem [shape: f32[32,1], index: 7, kind: output, shape index: {}]
  %s8 = sld [smem:[#allocation0]]
  $region46: #{cnn2_forward.1} parent=0
    _
  %s10 = ssub.s32 1, %s8
  %s11 = scalar_select 0, %s10, %s8
  %12 = sst [smem:[#allocation2]] %s6
  $region1: #{cnn2_forward.1} parent=0
    #allocation3 [shape = 'u8[512]{0}', space=smem, size = 0x200, scoped, tag = 'input window, operand 1, single buffered']
    #allocation4 [shape = 's32[1]{0}', space=sflag, size = 0x4, scoped, tag = 'scoped memory for cnn2_forward.1']
    #allocation5 [shape = 'u8[512]{0}', space=smem, size = 0x200, scoped, tag = 'input window, operand 2, single buffered']
    #allocation6 [shape = 's32[1]{0}', space=sflag, size = 0x4, scoped, tag = 'scoped memory for cnn2_forward.1']
    %13 = vsyncpa [#allocation4], 0
    %14 = vsyncpa [#allocation6], 0
    // Predicated region
    $region2: #{cnn2_forward.1} parent=1 // pred_check
      _
    $region3: #{cnn2_forward.1} parent=1 // pred_check_branch
      %16 = sbr.rel (0) target = $region5
    $region4: #{cnn2_forward.1} parent=1 // pred_region
      _
    $region5: #{cnn2_forward.1} parent=1 // pred_fallthru
      _
    // Predicated region
    $region6: #{cnn2_forward.1} parent=1 // pred_check
      _
    $region7: #{cnn2_forward.1} parent=1 // pred_check_branch
      %18 = sbr.rel (0) target = $region9
    $region8: #{cnn2_forward.1} parent=1 // pred_region
      %s20 = ssub.s32 16, 16
      %21 = vsyncadd [#allocation4], %s20
      %s23 = sshll.u32 %s1, 4
      %s24 = int_to_ptr.vmem [resolvable:$true] %s23
      %26 = dma.vmem_to_smem %s24, 16, [#allocation3], [#allocation4]
    $region9: #{cnn2_forward.1} parent=1 // pred_fallthru
      _
    // Predicated region
    $region10: #{cnn2_forward.1} parent=1 // pred_check
      _
    $region11: #{cnn2_forward.1} parent=1 // pred_check_branch
      %28 = sbr.rel (0) target = $region13
    $region12: #{cnn2_forward.1} parent=1 // pred_region
      %s30 = ssub.s32 16, 16
      %31 = vsyncadd [#allocation6], %s30
      %s33 = sshll.u32 %s2, 4
      %s34 = int_to_ptr.vmem [resolvable:$true] %s33
      %36 = dma.vmem_to_smem %s34, 16, [#allocation5], [#allocation6]
    $region13: #{cnn2_forward.1} parent=1 // pred_fallthru
      _
    // Predicated region
    $region14: #{cnn2_forward.1} parent=1 // pred_check
      _
    $region15: #{cnn2_forward.1} parent=1 // pred_check_branch
      %38 = sbr.rel (0) target = $region17
    $region16: #{cnn2_forward.1} parent=1 // pred_region
      _
    $region17: #{cnn2_forward.1} parent=1 // pred_fallthru
      _
    // Predicated region
    $region18: #{cnn2_forward.1} parent=1 // pred_check
      _
    $region19: #{cnn2_forward.1} parent=1 // pred_check_branch
      %40 = sbr.rel (0) target = $region21
    $region20: #{cnn2_forward.1} parent=1 // pred_region
      _
    $region21: #{cnn2_forward.1} parent=1 // pred_fallthru
      _
    // Predicated region
    $region22: #{cnn2_forward.1} parent=1 // pred_check
      _
    $region23: #{cnn2_forward.1} parent=1 // pred_check_branch
      %42 = sbr.rel (0) target = $region25
    $region24: #{cnn2_forward.1} parent=1 // pred_region
      _
    $region25: #{cnn2_forward.1} parent=1 // pred_fallthru
      _
    // Predicated region
    $region26: #{cnn2_forward.1} parent=1 // pred_check
      _
    $region27: #{cnn2_forward.1} parent=1 // pred_check_branch
      %44 = sbr.rel (0) target = $region29
    $region28: #{cnn2_forward.1} parent=1 // pred_region
      _
    $region29: #{cnn2_forward.1} parent=1 // pred_fallthru
      _
    // Predicated region
    $region30: #{cnn2_forward.1} parent=1 // pred_check
      _
    $region31: #{cnn2_forward.1} parent=1 // pred_check_branch
      %46 = sbr.rel (0) target = $region33
    $region32: #{cnn2_forward.1} parent=1 // pred_region
      %47 = dma.done [#allocation4], 16
    $region33: #{cnn2_forward.1} parent=1 // pred_fallthru
      _
    // Predicated region
    $region34: #{cnn2_forward.1} parent=1 // pred_check
      _
    $region35: #{cnn2_forward.1} parent=1 // pred_check_branch
      %49 = sbr.rel (0) target = $region37
    $region36: #{cnn2_forward.1} parent=1 // pred_region
      %50 = dma.done [#allocation6], 16
    $region37: #{cnn2_forward.1} parent=1 // pred_fallthru
      _
    %51 = sfence
    %s52 = sld [smem:[#allocation5]]
    %v53 = vstv %s52
    %v54 = vadd.f32 %v53, 0.0
    %s55 = sld [smem:[#allocation5 + $0x1]]
    %v56 = vstv %s55
    %v57 = vadd.f32 %v56, 0.0
    %s58 = sld [smem:[#allocation5 + $0x2]]
    %v59 = vstv %s58
    %v60 = vadd.f32 %v59, 0.0
    %s61 = sld [smem:[#allocation5 + $0x3]]
    %v62 = vstv %s61
    %v63 = vadd.f32 %v62, 0.0
    %v64 = vld [vmem:[%s0] sm:$0xff]
    %v65 = vld [vmem:[%s0 + $0x8] sm:$0xff]
    %s66 = sld [smem:[#allocation3]]
    %v67 = vstv %s66
    %v68 = vmul.f32 %v67, %v64
    %v69 = vmul.f32 %v67, %v65
    %v70 = vadd.f32 %v54, %v68
    %v71 = vadd.f32 %v54, %v69
    %s72 = sld [smem:[#allocation3 + $0x1e]]
    %v73 = vstv %s72
    %v74 = vmul.f32 %v73, %v64
    %v75 = vmul.f32 %v73, %v65
    %v76 = vadd.f32 %v57, %v74
    %v77 = vadd.f32 %v57, %v75
    %s78 = sld [smem:[#allocation3 + $0x3c]]
    %v79 = vstv %s78
    %v80 = vmul.f32 %v79, %v64
    %v81 = vmul.f32 %v79, %v65
    %v82 = vadd.f32 %v60, %v80
    %v83 = vadd.f32 %v60, %v81
    %s84 = sld [smem:[#allocation3 + $0x5a]]
    %v85 = vstv %s84
    %v86 = vmul.f32 %v85, %v64
    %v87 = vmul.f32 %v85, %v65
    %v88 = vadd.f32 %v63, %v86
    %v89 = vadd.f32 %v63, %v87
    %s90 = scalar_lea.vmem %s0, 16
    %v91 = vld [vmem:[%s90] sm:$0xff]
    %v92 = vld [vmem:[%s90 + $0x8] sm:$0xff]
    %s93 = sld [smem:[#allocation3 + $0x1]]
    %v94 = vstv %s93
    %v95 = vmul.f32 %v94, %v91
    %v96 = vmul.f32 %v94, %v92
    %v97 = vadd.f32 %v70, %v95
    %v98 = vadd.f32 %v71, %v96
    %s99 = sld [smem:[#allocation3 + $0x1f]]
    %v100 = vstv %s99
    %v101 = vmul.f32 %v100, %v91
    %v102 = vmul.f32 %v100, %v92
    %v103 = vadd.f32 %v76, %v101
    %v104 = vadd.f32 %v77, %v102
    %s105 = sld [smem:[#allocation3 + $0x3d]]
    %v106 = vstv %s105
    %v107 = vmul.f32 %v106, %v91
    %v108 = vmul.f32 %v106, %v92
    %v109 = vadd.f32 %v82, %v107
    %v110 = vadd.f32 %v83, %v108
    %s111 = sld [smem:[#allocation3 + $0x5b]]
    %v112 = vstv %s111
    %v113 = vmul.f32 %v112, %v91
    %v114 = vmul.f32 %v112, %v92
    %v115 = vadd.f32 %v88, %v113
    %v116 = vadd.f32 %v89, %v114
    %s117 = scalar_lea.vmem %s0, 32
    %v118 = vld [vmem:[%s117] sm:$0xff]
    %v119 = vld [vmem:[%s117 + $0x8] sm:$0xff]
    %s120 = sld [smem:[#allocation3 + $0x2]]
    %v121 = vstv %s120
    %v122 = vmul.f32 %v121, %v118
    %v123 = vmul.f32 %v121, %v119
    %v124 = vadd.f32 %v97, %v122
    %v125 = vadd.f32 %v98, %v123
    %s126 = sld [smem:[#allocation3 + $0x20]]
    %v127 = vstv %s126
    %v128 = vmul.f32 %v127, %v118
    %v129 = vmul.f32 %v127, %v119
    %v130 = vadd.f32 %v103, %v128
    %v131 = vadd.f32 %v104, %v129
    %s132 = sld [smem:[#allocation3 + $0x3e]]
    %v133 = vstv %s132
    %v134 = vmul.f32 %v133, %v118
    %v135 = vmul.f32 %v133, %v119
    %v136 = vadd.f32 %v109, %v134
    %v137 = vadd.f32 %v110, %v135
    %s138 = sld [smem:[#allocation3 + $0x5c]]
    %v139 = vstv %s138
    %v140 = vmul.f32 %v139, %v118
    %v141 = vmul.f32 %v139, %v119
    %v142 = vadd.f32 %v115, %v140
    %v143 = vadd.f32 %v116, %v141
    %s144 = scalar_lea.vmem %s0, 48
    %v145 = vld [vmem:[%s144] sm:$0xff]
    %v146 = vld [vmem:[%s144 + $0x8] sm:$0xff]
    %s147 = sld [smem:[#allocation3 + $0x3]]
    %v148 = vstv %s147
    %v149 = vmul.f32 %v148, %v145
    %v150 = vmul.f32 %v148, %v146
    %v151 = vadd.f32 %v124, %v149
    %v152 = vadd.f32 %v125, %v150
    %s153 = sld [smem:[#allocation3 + $0x21]]
    %v154 = vstv %s153
    %v155 = vmul.f32 %v154, %v145
    %v156 = vmul.f32 %v154, %v146
    %v157 = vadd.f32 %v130, %v155
    %v158 = vadd.f32 %v131, %v156
    %s159 = sld [smem:[#allocation3 + $0x3f]]
    %v160 = vstv %s159
    %v161 = vmul.f32 %v160, %v145
    %v162 = vmul.f32 %v160, %v146
    %v163 = vadd.f32 %v136, %v161
    %v164 = vadd.f32 %v137, %v162
    %s165 = sld [smem:[#allocation3 + $0x5d]]
    %v166 = vstv %s165
    %v167 = vmul.f32 %v166, %v145
    %v168 = vmul.f32 %v166, %v146
    %v169 = vadd.f32 %v142, %v167
    %v170 = vadd.f32 %v143, %v168
    %s171 = scalar_lea.vmem %s0, 64
    %v172 = vld [vmem:[%s171] sm:$0xff]
    %v173 = vld [vmem:[%s171 + $0x8] sm:$0xff]
    %s174 = sld [smem:[#allocation3 + $0x4]]
    %v175 = vstv %s174
    %v176 = vmul.f32 %v175, %v172
    %v177 = vmul.f32 %v175, %v173
    %v178 = vadd.f32 %v151, %v176
    %v179 = vadd.f32 %v152, %v177
    %s180 = sld [smem:[#allocation3 + $0x22]]
    %v181 = vstv %s180
    %v182 = vmul.f32 %v181, %v172
    %v183 = vmul.f32 %v181, %v173
    %v184 = vadd.f32 %v157, %v182
    %v185 = vadd.f32 %v158, %v183
    %s186 = sld [smem:[#allocation3 + $0x40]]
    %v187 = vstv %s186
    %v188 = vmul.f32 %v187, %v172
    %v189 = vmul.f32 %v187, %v173
    %v190 = vadd.f32 %v163, %v188
    %v191 = vadd.f32 %v164, %v189
    %s192 = sld [smem:[#allocation3 + $0x5e]]
    %v193 = vstv %s192
    %v194 = vmul.f32 %v193, %v172
    %v195 = vmul.f32 %v193, %v173
    %v196 = vadd.f32 %v169, %v194
    %v197 = vadd.f32 %v170, %v195
    %s198 = scalar_lea.vmem %s0, 80
    %v199 = vld [vmem:[%s198] sm:$0xff]
    %v200 = vld [vmem:[%s198 + $0x8] sm:$0xff]
    %s201 = sld [smem:[#allocation3 + $0x5]]
    %v202 = vstv %s201
    %v203 = vmul.f32 %v202, %v199
    %v204 = vmul.f32 %v202, %v200
    %v205 = vadd.f32 %v178, %v203
    %v206 = vadd.f32 %v179, %v204
    %s207 = sld [smem:[#allocation3 + $0x23]]
    %v208 = vstv %s207
    %v209 = vmul.f32 %v208, %v199
    %v210 = vmul.f32 %v208, %v200
    %v211 = vadd.f32 %v184, %v209
    %v212 = vadd.f32 %v185, %v210
    %s213 = sld [smem:[#allocation3 + $0x41]]
    %v214 = vstv %s213
    %v215 = vmul.f32 %v214, %v199
    %v216 = vmul.f32 %v214, %v200
    %v217 = vadd.f32 %v190, %v215
    %v218 = vadd.f32 %v191, %v216
    %s219 = sld [smem:[#allocation3 + $0x5f]]
    %v220 = vstv %s219
    %v221 = vmul.f32 %v220, %v199
    %v222 = vmul.f32 %v220, %v200
    %v223 = vadd.f32 %v196, %v221
    %v224 = vadd.f32 %v197, %v222
    %s225 = scalar_lea.vmem %s0, 96
    %v226 = vld [vmem:[%s225] sm:$0xff]
    %v227 = vld [vmem:[%s225 + $0x8] sm:$0xff]
    %s228 = sld [smem:[#allocation3 + $0x6]]
    %v229 = vstv %s228
    %v230 = vmul.f32 %v229, %v226
    %v231 = vmul.f32 %v229, %v227
    %v232 = vadd.f32 %v205, %v230
    %v233 = vadd.f32 %v206, %v231
    %s234 = sld [smem:[#allocation3 + $0x24]]
    %v235 = vstv %s234
    %v236 = vmul.f32 %v235, %v226
    %v237 = vmul.f32 %v235, %v227
    %v238 = vadd.f32 %v211, %v236
    %v239 = vadd.f32 %v212, %v237
    %s240 = sld [smem:[#allocation3 + $0x42]]
    %v241 = vstv %s240
    %v242 = vmul.f32 %v241, %v226
    %v243 = vmul.f32 %v241, %v227
    %v244 = vadd.f32 %v217, %v242
    %v245 = vadd.f32 %v218, %v243
    %s246 = sld [smem:[#allocation3 + $0x60]]
    %v247 = vstv %s246
    %v248 = vmul.f32 %v247, %v226
    %v249 = vmul.f32 %v247, %v227
    %v250 = vadd.f32 %v223, %v248
    %v251 = vadd.f32 %v224, %v249
    %s252 = scalar_lea.vmem %s0, 112
    %v253 = vld [vmem:[%s252] sm:$0xff]
    %v254 = vld [vmem:[%s252 + $0x8] sm:$0xff]
    %s255 = sld [smem:[#allocation3 + $0x7]]
    %v256 = vstv %s255
    %v257 = vmul.f32 %v256, %v253
    %v258 = vmul.f32 %v256, %v254
    %v259 = vadd.f32 %v232, %v257
    %v260 = vadd.f32 %v233, %v258
    %s261 = sld [smem:[#allocation3 + $0x25]]
    %v262 = vstv %s261
    %v263 = vmul.f32 %v262, %v253
    %v264 = vmul.f32 %v262, %v254
    %v265 = vadd.f32 %v238, %v263
    %v266 = vadd.f32 %v239, %v264
    %s267 = sld [smem:[#allocation3 + $0x43]]
    %v268 = vstv %s267
    %v269 = vmul.f32 %v268, %v253
    %v270 = vmul.f32 %v268, %v254
    %v271 = vadd.f32 %v244, %v269
    %v272 = vadd.f32 %v245, %v270
    %s273 = sld [smem:[#allocation3 + $0x61]]
    %v274 = vstv %s273
    %v275 = vmul.f32 %v274, %v253
    %v276 = vmul.f32 %v274, %v254
    %v277 = vadd.f32 %v250, %v275
    %v278 = vadd.f32 %v251, %v276
    %s279 = scalar_lea.vmem %s0, 128
    %v280 = vld [vmem:[%s279] sm:$0xff]
    %v281 = vld [vmem:[%s279 + $0x8] sm:$0xff]
    %s282 = sld [smem:[#allocation3 + $0x8]]
    %v283 = vstv %s282
    %v284 = vmul.f32 %v283, %v280
    %v285 = vmul.f32 %v283, %v281
    %v286 = vadd.f32 %v259, %v284
    %v287 = vadd.f32 %v260, %v285
    %s288 = sld [smem:[#allocation3 + $0x26]]
    %v289 = vstv %s288
    %v290 = vmul.f32 %v289, %v280
    %v291 = vmul.f32 %v289, %v281
    %v292 = vadd.f32 %v265, %v290
    %v293 = vadd.f32 %v266, %v291
    %s294 = sld [smem:[#allocation3 + $0x44]]
    %v295 = vstv %s294
    %v296 = vmul.f32 %v295, %v280
    %v297 = vmul.f32 %v295, %v281
    %v298 = vadd.f32 %v271, %v296
    %v299 = vadd.f32 %v272, %v297
    %s300 = sld [smem:[#allocation3 + $0x62]]
    %v301 = vstv %s300
    %v302 = vmul.f32 %v301, %v280
    %v303 = vmul.f32 %v301, %v281
    %v304 = vadd.f32 %v277, %v302
    %v305 = vadd.f32 %v278, %v303
    %s306 = scalar_lea.vmem %s0, 144
    %v307 = vld [vmem:[%s306] sm:$0xff]
    %v308 = vld [vmem:[%s306 + $0x8] sm:$0xff]
    %s309 = sld [smem:[#allocation3 + $0x9]]
    %v310 = vstv %s309
    %v311 = vmul.f32 %v310, %v307
    %v312 = vmul.f32 %v310, %v308
    %v313 = vadd.f32 %v286, %v311
    %v314 = vadd.f32 %v287, %v312
    %s315 = sld [smem:[#allocation3 + $0x27]]
    %v316 = vstv %s315
    %v317 = vmul.f32 %v316, %v307
    %v318 = vmul.f32 %v316, %v308
    %v319 = vadd.f32 %v292, %v317
    %v320 = vadd.f32 %v293, %v318
    %s321 = sld [smem:[#allocation3 + $0x45]]
    %v322 = vstv %s321
    %v323 = vmul.f32 %v322, %v307
    %v324 = vmul.f32 %v322, %v308
    %v325 = vadd.f32 %v298, %v323
    %v326 = vadd.f32 %v299, %v324
    %s327 = sld [smem:[#allocation3 + $0x63]]
    %v328 = vstv %s327
    %v329 = vmul.f32 %v328, %v307
    %v330 = vmul.f32 %v328, %v308
    %v331 = vadd.f32 %v304, %v329
    %v332 = vadd.f32 %v305, %v330
    %s333 = scalar_lea.vmem %s0, 160
    %v334 = vld [vmem:[%s333] sm:$0xff]
    %v335 = vld [vmem:[%s333 + $0x8] sm:$0xff]
    %s336 = sld [smem:[#allocation3 + $0xa]]
    %v337 = vstv %s336
    %v338 = vmul.f32 %v337, %v334
    %v339 = vmul.f32 %v337, %v335
    %v340 = vadd.f32 %v313, %v338
    %v341 = vadd.f32 %v314, %v339
    %s342 = sld [smem:[#allocation3 + $0x28]]
    %v343 = vstv %s342
    %v344 = vmul.f32 %v343, %v334
    %v345 = vmul.f32 %v343, %v335
    %v346 = vadd.f32 %v319, %v344
    %v347 = vadd.f32 %v320, %v345
    %s348 = sld [smem:[#allocation3 + $0x46]]
    %v349 = vstv %s348
    %v350 = vmul.f32 %v349, %v334
    %v351 = vmul.f32 %v349, %v335
    %v352 = vadd.f32 %v325, %v350
    %v353 = vadd.f32 %v326, %v351
    %s354 = sld [smem:[#allocation3 + $0x64]]
    %v355 = vstv %s354
    %v356 = vmul.f32 %v355, %v334
    %v357 = vmul.f32 %v355, %v335
    %v358 = vadd.f32 %v331, %v356
    %v359 = vadd.f32 %v332, %v357
    %s360 = scalar_lea.vmem %s0, 176
    %v361 = vld [vmem:[%s360] sm:$0xff]
    %v362 = vld [vmem:[%s360 + $0x8] sm:$0xff]
    %s363 = sld [smem:[#allocation3 + $0xb]]
    %v364 = vstv %s363
    %v365 = vmul.f32 %v364, %v361
    %v366 = vmul.f32 %v364, %v362
    %v367 = vadd.f32 %v340, %v365
    %v368 = vadd.f32 %v341, %v366
    %s369 = sld [smem:[#allocation3 + $0x29]]
    %v370 = vstv %s369
    %v371 = vmul.f32 %v370, %v361
    %v372 = vmul.f32 %v370, %v362
    %v373 = vadd.f32 %v346, %v371
    %v374 = vadd.f32 %v347, %v372
    %s375 = sld [smem:[#allocation3 + $0x47]]
    %v376 = vstv %s375
    %v377 = vmul.f32 %v376, %v361
    %v378 = vmul.f32 %v376, %v362
    %v379 = vadd.f32 %v352, %v377
    %v380 = vadd.f32 %v353, %v378
    %s381 = sld [smem:[#allocation3 + $0x65]]
    %v382 = vstv %s381
    %v383 = vmul.f32 %v382, %v361
    %v384 = vmul.f32 %v382, %v362
    %v385 = vadd.f32 %v358, %v383
    %v386 = vadd.f32 %v359, %v384
    %s387 = scalar_lea.vmem %s0, 192
    %v388 = vld [vmem:[%s387] sm:$0xff]
    %v389 = vld [vmem:[%s387 + $0x8] sm:$0xff]
    %s390 = sld [smem:[#allocation3 + $0xc]]
    %v391 = vstv %s390
    %v392 = vmul.f32 %v391, %v388
    %v393 = vmul.f32 %v391, %v389
    %v394 = vadd.f32 %v367, %v392
    %v395 = vadd.f32 %v368, %v393
    %s396 = sld [smem:[#allocation3 + $0x2a]]
    %v397 = vstv %s396
    %v398 = vmul.f32 %v397, %v388
    %v399 = vmul.f32 %v397, %v389
    %v400 = vadd.f32 %v373, %v398
    %v401 = vadd.f32 %v374, %v399
    %s402 = sld [smem:[#allocation3 + $0x48]]
    %v403 = vstv %s402
    %v404 = vmul.f32 %v403, %v388
    %v405 = vmul.f32 %v403, %v389
    %v406 = vadd.f32 %v379, %v404
    %v407 = vadd.f32 %v380, %v405
    %s408 = sld [smem:[#allocation3 + $0x66]]
    %v409 = vstv %s408
    %v410 = vmul.f32 %v409, %v388
    %v411 = vmul.f32 %v409, %v389
    %v412 = vadd.f32 %v385, %v410
    %v413 = vadd.f32 %v386, %v411
    %s414 = scalar_lea.vmem %s0, 208
    %v415 = vld [vmem:[%s414] sm:$0xff]
    %v416 = vld [vmem:[%s414 + $0x8] sm:$0xff]
    %s417 = sld [smem:[#allocation3 + $0xd]]
    %v418 = vstv %s417
    %v419 = vmul.f32 %v418, %v415
    %v420 = vmul.f32 %v418, %v416
    %v421 = vadd.f32 %v394, %v419
    %v422 = vadd.f32 %v395, %v420
    %s423 = sld [smem:[#allocation3 + $0x2b]]
    %v424 = vstv %s423
    %v425 = vmul.f32 %v424, %v415
    %v426 = vmul.f32 %v424, %v416
    %v427 = vadd.f32 %v400, %v425
    %v428 = vadd.f32 %v401, %v426
    %s429 = sld [smem:[#allocation3 + $0x49]]
    %v430 = vstv %s429
    %v431 = vmul.f32 %v430, %v415
    %v432 = vmul.f32 %v430, %v416
    %v433 = vadd.f32 %v406, %v431
    %v434 = vadd.f32 %v407, %v432
    %s435 = sld [smem:[#allocation3 + $0x67]]
    %v436 = vstv %s435
    %v437 = vmul.f32 %v436, %v415
    %v438 = vmul.f32 %v436, %v416
    %v439 = vadd.f32 %v412, %v437
    %v440 = vadd.f32 %v413, %v438
    %s441 = scalar_lea.vmem %s0, 224
    %v442 = vld [vmem:[%s441] sm:$0xff]
    %v443 = vld [vmem:[%s441 + $0x8] sm:$0xff]
    %s444 = sld [smem:[#allocation3 + $0xe]]
    %v445 = vstv %s444
    %v446 = vmul.f32 %v445, %v442
    %v447 = vmul.f32 %v445, %v443
    %v448 = vadd.f32 %v421, %v446
    %v449 = vadd.f32 %v422, %v447
    %s450 = sld [smem:[#allocation3 + $0x2c]]
    %v451 = vstv %s450
    %v452 = vmul.f32 %v451, %v442
    %v453 = vmul.f32 %v451, %v443
    %v454 = vadd.f32 %v427, %v452
    %v455 = vadd.f32 %v428, %v453
    %s456 = sld [smem:[#allocation3 + $0x4a]]
    %v457 = vstv %s456
    %v458 = vmul.f32 %v457, %v442
    %v459 = vmul.f32 %v457, %v443
    %v460 = vadd.f32 %v433, %v458
    %v461 = vadd.f32 %v434, %v459
    %s462 = sld [smem:[#allocation3 + $0x68]]
    %v463 = vstv %s462
    %v464 = vmul.f32 %v463, %v442
    %v465 = vmul.f32 %v463, %v443
    %v466 = vadd.f32 %v439, %v464
    %v467 = vadd.f32 %v440, %v465
    %s468 = scalar_lea.vmem %s0, 240
    %v469 = vld [vmem:[%s468] sm:$0xff]
    %v470 = vld [vmem:[%s468 + $0x8] sm:$0xff]
    %s471 = sld [smem:[#allocation3 + $0xf]]
    %v472 = vstv %s471
    %v473 = vmul.f32 %v472, %v469
    %v474 = vmul.f32 %v472, %v470
    %v475 = vadd.f32 %v448, %v473
    %v476 = vadd.f32 %v449, %v474
    %s477 = sld [smem:[#allocation3 + $0x2d]]
    %v478 = vstv %s477
    %v479 = vmul.f32 %v478, %v469
    %v480 = vmul.f32 %v478, %v470
    %v481 = vadd.f32 %v454, %v479
    %v482 = vadd.f32 %v455, %v480
    %s483 = sld [smem:[#allocation3 + $0x4b]]
    %v484 = vstv %s483
    %v485 = vmul.f32 %v484, %v469
    %v486 = vmul.f32 %v484, %v470
    %v487 = vadd.f32 %v460, %v485
    %v488 = vadd.f32 %v461, %v486
    %s489 = sld [smem:[#allocation3 + $0x69]]
    %v490 = vstv %s489
    %v491 = vmul.f32 %v490, %v469
    %v492 = vmul.f32 %v490, %v470
    %v493 = vadd.f32 %v466, %v491
    %v494 = vadd.f32 %v467, %v492
    %s495 = scalar_lea.vmem %s0, 256
    %v496 = vld [vmem:[%s495] sm:$0xff]
    %v497 = vld [vmem:[%s495 + $0x8] sm:$0xff]
    %s498 = sld [smem:[#allocation3 + $0x10]]
    %v499 = vstv %s498
    %v500 = vmul.f32 %v499, %v496
    %v501 = vmul.f32 %v499, %v497
    %v502 = vadd.f32 %v475, %v500
    %v503 = vadd.f32 %v476, %v501
    %s504 = sld [smem:[#allocation3 + $0x2e]]
    %v505 = vstv %s504
    %v506 = vmul.f32 %v505, %v496
    %v507 = vmul.f32 %v505, %v497
    %v508 = vadd.f32 %v481, %v506
    %v509 = vadd.f32 %v482, %v507
    %s510 = sld [smem:[#allocation3 + $0x4c]]
    %v511 = vstv %s510
    %v512 = vmul.f32 %v511, %v496
    %v513 = vmul.f32 %v511, %v497
    %v514 = vadd.f32 %v487, %v512
    %v515 = vadd.f32 %v488, %v513
    %s516 = sld [smem:[#allocation3 + $0x6a]]
    %v517 = vstv %s516
    %v518 = vmul.f32 %v517, %v496
    %v519 = vmul.f32 %v517, %v497
    %v520 = vadd.f32 %v493, %v518
    %v521 = vadd.f32 %v494, %v519
    %s522 = scalar_lea.vmem %s0, 272
    %v523 = vld [vmem:[%s522] sm:$0xff]
    %v524 = vld [vmem:[%s522 + $0x8] sm:$0xff]
    %s525 = sld [smem:[#allocation3 + $0x11]]
    %v526 = vstv %s525
    %v527 = vmul.f32 %v526, %v523
    %v528 = vmul.f32 %v526, %v524
    %v529 = vadd.f32 %v502, %v527
    %v530 = vadd.f32 %v503, %v528
    %s531 = sld [smem:[#allocation3 + $0x2f]]
    %v532 = vstv %s531
    %v533 = vmul.f32 %v532, %v523
    %v534 = vmul.f32 %v532, %v524
    %v535 = vadd.f32 %v508, %v533
    %v536 = vadd.f32 %v509, %v534
    %s537 = sld [smem:[#allocation3 + $0x4d]]
    %v538 = vstv %s537
    %v539 = vmul.f32 %v538, %v523
    %v540 = vmul.f32 %v538, %v524
    %v541 = vadd.f32 %v514, %v539
    %v542 = vadd.f32 %v515, %v540
    %s543 = sld [smem:[#allocation3 + $0x6b]]
    %v544 = vstv %s543
    %v545 = vmul.f32 %v544, %v523
    %v546 = vmul.f32 %v544, %v524
    %v547 = vadd.f32 %v520, %v545
    %v548 = vadd.f32 %v521, %v546
    %s549 = scalar_lea.vmem %s0, 288
    %v550 = vld [vmem:[%s549] sm:$0xff]
    %v551 = vld [vmem:[%s549 + $0x8] sm:$0xff]
    %s552 = sld [smem:[#allocation3 + $0x12]]
    %v553 = vstv %s552
    %v554 = vmul.f32 %v553, %v550
    %v555 = vmul.f32 %v553, %v551
    %v556 = vadd.f32 %v529, %v554
    %v557 = vadd.f32 %v530, %v555
    %s558 = sld [smem:[#allocation3 + $0x30]]
    %v559 = vstv %s558
    %v560 = vmul.f32 %v559, %v550
    %v561 = vmul.f32 %v559, %v551
    %v562 = vadd.f32 %v535, %v560
    %v563 = vadd.f32 %v536, %v561
    %s564 = sld [smem:[#allocation3 + $0x4e]]
    %v565 = vstv %s564
    %v566 = vmul.f32 %v565, %v550
    %v567 = vmul.f32 %v565, %v551
    %v568 = vadd.f32 %v541, %v566
    %v569 = vadd.f32 %v542, %v567
    %s570 = sld [smem:[#allocation3 + $0x6c]]
    %v571 = vstv %s570
    %v572 = vmul.f32 %v571, %v550
    %v573 = vmul.f32 %v571, %v551
    %v574 = vadd.f32 %v547, %v572
    %v575 = vadd.f32 %v548, %v573
    %s576 = scalar_lea.vmem %s0, 304
    %v577 = vld [vmem:[%s576] sm:$0xff]
    %v578 = vld [vmem:[%s576 + $0x8] sm:$0xff]
    %s579 = sld [smem:[#allocation3 + $0x13]]
    %v580 = vstv %s579
    %v581 = vmul.f32 %v580, %v577
    %v582 = vmul.f32 %v580, %v578
    %v583 = vadd.f32 %v556, %v581
    %v584 = vadd.f32 %v557, %v582
    %s585 = sld [smem:[#allocation3 + $0x31]]
    %v586 = vstv %s585
    %v587 = vmul.f32 %v586, %v577
    %v588 = vmul.f32 %v586, %v578
    %v589 = vadd.f32 %v562, %v587
    %v590 = vadd.f32 %v563, %v588
    %s591 = sld [smem:[#allocation3 + $0x4f]]
    %v592 = vstv %s591
    %v593 = vmul.f32 %v592, %v577
    %v594 = vmul.f32 %v592, %v578
    %v595 = vadd.f32 %v568, %v593
    %v596 = vadd.f32 %v569, %v594
    %s597 = sld [smem:[#allocation3 + $0x6d]]
    %v598 = vstv %s597
    %v599 = vmul.f32 %v598, %v577
    %v600 = vmul.f32 %v598, %v578
    %v601 = vadd.f32 %v574, %v599
    %v602 = vadd.f32 %v575, %v600
    %s603 = scalar_lea.vmem %s0, 320
    %v604 = vld [vmem:[%s603] sm:$0xff]
    %v605 = vld [vmem:[%s603 + $0x8] sm:$0xff]
    %s606 = sld [smem:[#allocation3 + $0x14]]
    %v607 = vstv %s606
    %v608 = vmul.f32 %v607, %v604
    %v609 = vmul.f32 %v607, %v605
    %v610 = vadd.f32 %v583, %v608
    %v611 = vadd.f32 %v584, %v609
    %s612 = sld [smem:[#allocation3 + $0x32]]
    %v613 = vstv %s612
    %v614 = vmul.f32 %v613, %v604
    %v615 = vmul.f32 %v613, %v605
    %v616 = vadd.f32 %v589, %v614
    %v617 = vadd.f32 %v590, %v615
    %s618 = sld [smem:[#allocation3 + $0x50]]
    %v619 = vstv %s618
    %v620 = vmul.f32 %v619, %v604
    %v621 = vmul.f32 %v619, %v605
    %v622 = vadd.f32 %v595, %v620
    %v623 = vadd.f32 %v596, %v621
    %s624 = sld [smem:[#allocation3 + $0x6e]]
    %v625 = vstv %s624
    %v626 = vmul.f32 %v625, %v604
    %v627 = vmul.f32 %v625, %v605
    %v628 = vadd.f32 %v601, %v626
    %v629 = vadd.f32 %v602, %v627
    %s630 = scalar_lea.vmem %s0, 336
    %v631 = vld [vmem:[%s630] sm:$0xff]
    %v632 = vld [vmem:[%s630 + $0x8] sm:$0xff]
    %s633 = sld [smem:[#allocation3 + $0x15]]
    %v634 = vstv %s633
    %v635 = vmul.f32 %v634, %v631
    %v636 = vmul.f32 %v634, %v632
    %v637 = vadd.f32 %v610, %v635
    %v638 = vadd.f32 %v611, %v636
    %s639 = sld [smem:[#allocation3 + $0x33]]
    %v640 = vstv %s639
    %v641 = vmul.f32 %v640, %v631
    %v642 = vmul.f32 %v640, %v632
    %v643 = vadd.f32 %v616, %v641
    %v644 = vadd.f32 %v617, %v642
    %s645 = sld [smem:[#allocation3 + $0x51]]
    %v646 = vstv %s645
    %v647 = vmul.f32 %v646, %v631
    %v648 = vmul.f32 %v646, %v632
    %v649 = vadd.f32 %v622, %v647
    %v650 = vadd.f32 %v623, %v648
    %s651 = sld [smem:[#allocation3 + $0x6f]]
    %v652 = vstv %s651
    %v653 = vmul.f32 %v652, %v631
    %v654 = vmul.f32 %v652, %v632
    %v655 = vadd.f32 %v628, %v653
    %v656 = vadd.f32 %v629, %v654
    %s657 = scalar_lea.vmem %s0, 352
    %v658 = vld [vmem:[%s657] sm:$0xff]
    %v659 = vld [vmem:[%s657 + $0x8] sm:$0xff]
    %s660 = sld [smem:[#allocation3 + $0x16]]
    %v661 = vstv %s660
    %v662 = vmul.f32 %v661, %v658
    %v663 = vmul.f32 %v661, %v659
    %v664 = vadd.f32 %v637, %v662
    %v665 = vadd.f32 %v638, %v663
    %s666 = sld [smem:[#allocation3 + $0x34]]
    %v667 = vstv %s666
    %v668 = vmul.f32 %v667, %v658
    %v669 = vmul.f32 %v667, %v659
    %v670 = vadd.f32 %v643, %v668
    %v671 = vadd.f32 %v644, %v669
    %s672 = sld [smem:[#allocation3 + $0x52]]
    %v673 = vstv %s672
    %v674 = vmul.f32 %v673, %v658
    %v675 = vmul.f32 %v673, %v659
    %v676 = vadd.f32 %v649, %v674
    %v677 = vadd.f32 %v650, %v675
    %s678 = sld [smem:[#allocation3 + $0x70]]
    %v679 = vstv %s678
    %v680 = vmul.f32 %v679, %v658
    %v681 = vmul.f32 %v679, %v659
    %v682 = vadd.f32 %v655, %v680
    %v683 = vadd.f32 %v656, %v681
    %s684 = scalar_lea.vmem %s0, 368
    %v685 = vld [vmem:[%s684] sm:$0xff]
    %v686 = vld [vmem:[%s684 + $0x8] sm:$0xff]
    %s687 = sld [smem:[#allocation3 + $0x17]]
    %v688 = vstv %s687
    %v689 = vmul.f32 %v688, %v685
    %v690 = vmul.f32 %v688, %v686
    %v691 = vadd.f32 %v664, %v689
    %v692 = vadd.f32 %v665, %v690
    %s693 = sld [smem:[#allocation3 + $0x35]]
    %v694 = vstv %s693
    %v695 = vmul.f32 %v694, %v685
    %v696 = vmul.f32 %v694, %v686
    %v697 = vadd.f32 %v670, %v695
    %v698 = vadd.f32 %v671, %v696
    %s699 = sld [smem:[#allocation3 + $0x53]]
    %v700 = vstv %s699
    %v701 = vmul.f32 %v700, %v685
    %v702 = vmul.f32 %v700, %v686
    %v703 = vadd.f32 %v676, %v701
    %v704 = vadd.f32 %v677, %v702
    %s705 = sld [smem:[#allocation3 + $0x71]]
    %v706 = vstv %s705
    %v707 = vmul.f32 %v706, %v685
    %v708 = vmul.f32 %v706, %v686
    %v709 = vadd.f32 %v682, %v707
    %v710 = vadd.f32 %v683, %v708
    %s711 = scalar_lea.vmem %s0, 384
    %v712 = vld [vmem:[%s711] sm:$0xff]
    %v713 = vld [vmem:[%s711 + $0x8] sm:$0xff]
    %s714 = sld [smem:[#allocation3 + $0x18]]
    %v715 = vstv %s714
    %v716 = vmul.f32 %v715, %v712
    %v717 = vmul.f32 %v715, %v713
    %v718 = vadd.f32 %v691, %v716
    %v719 = vadd.f32 %v692, %v717
    %s720 = sld [smem:[#allocation3 + $0x36]]
    %v721 = vstv %s720
    %v722 = vmul.f32 %v721, %v712
    %v723 = vmul.f32 %v721, %v713
    %v724 = vadd.f32 %v697, %v722
    %v725 = vadd.f32 %v698, %v723
    %s726 = sld [smem:[#allocation3 + $0x54]]
    %v727 = vstv %s726
    %v728 = vmul.f32 %v727, %v712
    %v729 = vmul.f32 %v727, %v713
    %v730 = vadd.f32 %v703, %v728
    %v731 = vadd.f32 %v704, %v729
    %s732 = sld [smem:[#allocation3 + $0x72]]
    %v733 = vstv %s732
    %v734 = vmul.f32 %v733, %v712
    %v735 = vmul.f32 %v733, %v713
    %v736 = vadd.f32 %v709, %v734
    %v737 = vadd.f32 %v710, %v735
    %s738 = scalar_lea.vmem %s0, 400
    %v739 = vld [vmem:[%s738] sm:$0xff]
    %v740 = vld [vmem:[%s738 + $0x8] sm:$0xff]
    %s741 = sld [smem:[#allocation3 + $0x19]]
    %v742 = vstv %s741
    %v743 = vmul.f32 %v742, %v739
    %v744 = vmul.f32 %v742, %v740
    %v745 = vadd.f32 %v718, %v743
    %v746 = vadd.f32 %v719, %v744
    %s747 = sld [smem:[#allocation3 + $0x37]]
    %v748 = vstv %s747
    %v749 = vmul.f32 %v748, %v739
    %v750 = vmul.f32 %v748, %v740
    %v751 = vadd.f32 %v724, %v749
    %v752 = vadd.f32 %v725, %v750
    %s753 = sld [smem:[#allocation3 + $0x55]]
    %v754 = vstv %s753
    %v755 = vmul.f32 %v754, %v739
    %v756 = vmul.f32 %v754, %v740
    %v757 = vadd.f32 %v730, %v755
    %v758 = vadd.f32 %v731, %v756
    %s759 = sld [smem:[#allocation3 + $0x73]]
    %v760 = vstv %s759
    %v761 = vmul.f32 %v760, %v739
    %v762 = vmul.f32 %v760, %v740
    %v763 = vadd.f32 %v736, %v761
    %v764 = vadd.f32 %v737, %v762
    %s765 = scalar_lea.vmem %s0, 416
    %v766 = vld [vmem:[%s765] sm:$0xff]
    %v767 = vld [vmem:[%s765 + $0x8] sm:$0xff]
    %s768 = sld [smem:[#allocation3 + $0x1a]]
    %v769 = vstv %s768
    %v770 = vmul.f32 %v769, %v766
    %v771 = vmul.f32 %v769, %v767
    %v772 = vadd.f32 %v745, %v770
    %v773 = vadd.f32 %v746, %v771
    %s774 = sld [smem:[#allocation3 + $0x38]]
    %v775 = vstv %s774
    %v776 = vmul.f32 %v775, %v766
    %v777 = vmul.f32 %v775, %v767
    %v778 = vadd.f32 %v751, %v776
    %v779 = vadd.f32 %v752, %v777
    %s780 = sld [smem:[#allocation3 + $0x56]]
    %v781 = vstv %s780
    %v782 = vmul.f32 %v781, %v766
    %v783 = vmul.f32 %v781, %v767
    %v784 = vadd.f32 %v757, %v782
    %v785 = vadd.f32 %v758, %v783
    %s786 = sld [smem:[#allocation3 + $0x74]]
    %v787 = vstv %s786
    %v788 = vmul.f32 %v787, %v766
    %v789 = vmul.f32 %v787, %v767
    %v790 = vadd.f32 %v763, %v788
    %v791 = vadd.f32 %v764, %v789
    %s792 = scalar_lea.vmem %s0, 432
    %v793 = vld [vmem:[%s792] sm:$0xff]
    %v794 = vld [vmem:[%s792 + $0x8] sm:$0xff]
    %s795 = sld [smem:[#allocation3 + $0x1b]]
    %v796 = vstv %s795
    %v797 = vmul.f32 %v796, %v793
    %v798 = vmul.f32 %v796, %v794
    %v799 = vadd.f32 %v772, %v797
    %v800 = vadd.f32 %v773, %v798
    %s801 = sld [smem:[#allocation3 + $0x39]]
    %v802 = vstv %s801
    %v803 = vmul.f32 %v802, %v793
    %v804 = vmul.f32 %v802, %v794
    %v805 = vadd.f32 %v778, %v803
    %v806 = vadd.f32 %v779, %v804
    %s807 = sld [smem:[#allocation3 + $0x57]]
    %v808 = vstv %s807
    %v809 = vmul.f32 %v808, %v793
    %v810 = vmul.f32 %v808, %v794
    %v811 = vadd.f32 %v784, %v809
    %v812 = vadd.f32 %v785, %v810
    %s813 = sld [smem:[#allocation3 + $0x75]]
    %v814 = vstv %s813
    %v815 = vmul.f32 %v814, %v793
    %v816 = vmul.f32 %v814, %v794
    %v817 = vadd.f32 %v790, %v815
    %v818 = vadd.f32 %v791, %v816
    %s819 = scalar_lea.vmem %s0, 448
    %v820 = vld [vmem:[%s819] sm:$0xff]
    %v821 = vld [vmem:[%s819 + $0x8] sm:$0xff]
    %s822 = sld [smem:[#allocation3 + $0x1c]]
    %v823 = vstv %s822
    %v824 = vmul.f32 %v823, %v820
    %v825 = vmul.f32 %v823, %v821
    %v826 = vadd.f32 %v799, %v824
    %v827 = vadd.f32 %v800, %v825
    %s828 = sld [smem:[#allocation3 + $0x3a]]
    %v829 = vstv %s828
    %v830 = vmul.f32 %v829, %v820
    %v831 = vmul.f32 %v829, %v821
    %v832 = vadd.f32 %v805, %v830
    %v833 = vadd.f32 %v806, %v831
    %s834 = sld [smem:[#allocation3 + $0x58]]
    %v835 = vstv %s834
    %v836 = vmul.f32 %v835, %v820
    %v837 = vmul.f32 %v835, %v821
    %v838 = vadd.f32 %v811, %v836
    %v839 = vadd.f32 %v812, %v837
    %s840 = sld [smem:[#allocation3 + $0x76]]
    %v841 = vstv %s840
    %v842 = vmul.f32 %v841, %v820
    %v843 = vmul.f32 %v841, %v821
    %v844 = vadd.f32 %v817, %v842
    %v845 = vadd.f32 %v818, %v843
    %s846 = scalar_lea.vmem %s0, 464
    %v847 = vld [vmem:[%s846] sm:$0xff]
    %v848 = vld [vmem:[%s846 + $0x8] sm:$0xff]
    %s849 = sld [smem:[#allocation3 + $0x1d]]
    %v850 = vstv %s849
    %v851 = vmul.f32 %v850, %v847
    %v852 = vmul.f32 %v850, %v848
    %v853 = vadd.f32 %v826, %v851
    %v854 = vadd.f32 %v827, %v852
    %s855 = sld [smem:[#allocation3 + $0x3b]]
    %v856 = vstv %s855
    %v857 = vmul.f32 %v856, %v847
    %v858 = vmul.f32 %v856, %v848
    %v859 = vadd.f32 %v832, %v857
    %v860 = vadd.f32 %v833, %v858
    %s861 = sld [smem:[#allocation3 + $0x59]]
    %v862 = vstv %s861
    %v863 = vmul.f32 %v862, %v847
    %v864 = vmul.f32 %v862, %v848
    %v865 = vadd.f32 %v838, %v863
    %v866 = vadd.f32 %v839, %v864
    %s867 = sld [smem:[#allocation3 + $0x77]]
    %v868 = vstv %s867
    %v869 = vmul.f32 %v868, %v847
    %v870 = vmul.f32 %v868, %v848
    %v871 = vadd.f32 %v844, %v869
    %v872 = vadd.f32 %v845, %v870
    %v873 = vld [vmem:[%s4] sm:$0x1]
    %v874 = vmul.f32 %v853, 0.01
    %v875 = vmul.f32 %v854, 0.01
    %v876 = vmax.f32 %v853, %v874
    %v877 = vmax.f32 %v854, %v875
    %880 = vrot.lane.b32.xlu0 %v876, 64
    %v881 = vpop.permute.xlu0 %880
    %882 = vrot.lane.b32.xlu0 %v877, 64
    %v883 = vpop.permute.xlu0 %882
    %v884 = vld [vmem:[%s3] sm:$0xff]
    %v885 = vld [vmem:[%s3 + $0x8] sm:$0xff]
    %v886 = vld [vmem:[%s3 + $0x10] sm:$0xff]
    %v887 = vld [vmem:[%s3 + $0x18] sm:$0xff]
    %v888 = vld [vmem:[%s3 + $0x20] sm:$0xff]
    %v889 = vld [vmem:[%s3 + $0x28] sm:$0xff]
    %v890 = vld [vmem:[%s3 + $0x30] sm:$0xff]
    %v891 = vld [vmem:[%s3 + $0x38] sm:$0xf]
    %vm892 = vcmask 490496
    %v893 = vsel %vm892, %v876, 0
    %v895 = vsel %vm892, %v877, 0
    %v897 = vsel %vm892, %v881, 0
    %v899 = vsel %vm892, %v883, 0
    %vm901 = vcmask 1043456
    %v903 = vsel %vm901, %v891, 0
    %905 = vmatprep.subr.mxu0 0.0
    %906 = vmatpush1.msra.mxu0 %v884
    %907 = vmatprep.subr.mxu0 0.0
    %908 = vmatpush1.msra.mxu0 %v885
    %909 = vmatprep.subr.mxu0 0.0
    %910 = vmatpush1.msra.mxu0 %v886
    %911 = vmatprep.subr.mxu0 0.0
    %912 = vmatpush1.msra.mxu0 %v887
    %913 = vmatprep.subr.mxu0 0.0
    %914 = vmatpush1.msra.mxu0 %v888
    %915 = vmatprep.subr.mxu0 0.0
    %916 = vmatpush1.msra.mxu0 %v889
    %917 = vmatprep.subr.mxu0 0.0
    %918 = vmatpush1.msra.mxu0 %v890
    %919 = vmatprep.subr.mxu0 0.0
    %920 = vmatpush1.msra.mxu0 %v903
    %921 = vmatprep.subr.mxu0 0.0
    %922 = vmatpush1.msra.mxu0 0.0
    %923 = vmatprep.subr.mxu0 0.0
    %924 = vmatpush1.msra.mxu0 0.0
    %925 = vmatprep.subr.mxu0 0.0
    %926 = vmatpush1.msra.mxu0 0.0
    %927 = vmatprep.subr.mxu0 0.0
    %928 = vmatpush1.msra.mxu0 0.0
    %929 = vmatprep.subr.mxu0 0.0
    %930 = vmatpush1.msra.mxu0 0.0
    %931 = vmatprep.subr.mxu0 0.0
    %932 = vmatpush1.msra.mxu0 0.0
    %933 = vmatprep.subr.mxu0 0.0
    %934 = vmatpush1.msra.mxu0 0.0
    %935 = vmatprep.subr.mxu0 0.0
    %936 = vmatpush1.msra.mxu0 0.0
    %937 = vmatprep.subr.mxu0 0.0
    %938 = vmatpush1.msra.mxu0 0.0
    %939 = vmatprep.subr.mxu0 0.0
    %940 = vmatpush1.msra.mxu0 0.0
    %941 = vmatprep.subr.mxu0 0.0
    %942 = vmatpush1.msra.mxu0 0.0
    %943 = vmatprep.subr.mxu0 0.0
    %944 = vmatpush1.msra.mxu0 0.0
    %945 = vmatprep.subr.mxu0 0.0
    %946 = vmatpush1.msra.mxu0 0.0
    %947 = vmatprep.subr.mxu0 0.0
    %948 = vmatpush1.msra.mxu0 0.0
    %949 = vmatprep.subr.mxu0 0.0
    %950 = vmatpush1.msra.mxu0 0.0
    %951 = vmatprep.subr.mxu0 0.0
    %952 = vmatpush1.msra.mxu0 0.0
    %953 = vmatprep.subr.mxu0 0.0
    %954 = vmatpush1.msra.mxu0 0.0
    %955 = vmatprep.subr.mxu0 0.0
    %956 = vmatpush1.msra.mxu0 0.0
    %957 = vmatprep.subr.mxu0 0.0
    %958 = vmatpush1.msra.mxu0 0.0
    %959 = vmatprep.subr.mxu0 0.0
    %960 = vmatpush1.msra.mxu0 0.0
    %961 = vmatprep.subr.mxu0 0.0
    %962 = vmatpush1.msra.mxu0 0.0
    %963 = vmatprep.subr.mxu0 0.0
    %964 = vmatpush1.msra.mxu0 0.0
    %965 = vmatprep.subr.mxu0 0.0
    %966 = vmatpush1.msra.mxu0 0.0
    %967 = vmatprep.subr.mxu0 0.0
    %968 = vmatpush1.msra.mxu0 0.0
    %969 = vmatprep.mubr.f32.mxu0 0.0
    %970 = vmatmul.mubr.f32.gmra.mrb[0].mxu0 %v893
    %v971 = vpop.f32.mrb[0].mxu0
    %v972 = vadd.f32 0.0, %v971
    %v973 = vpop.f32.mrb[0].mxu0
    %974 = vmatprep.mubr.f32.mxu0 0.0
    %975 = vmatmul.mubr.f32.gmra.mrb[0].mxu0 %v895
    %v976 = vpop.f32.mrb[0].mxu0
    %v977 = vadd.f32 0.0, %v976
    %v978 = vpop.f32.mrb[0].mxu0
    %979 = vmatprep.mubr.f32.mxu0 0.0
    %980 = vmatmul.mubr.f32.gmra.mrb[0].mxu0 %v897
    %v981 = vpop.f32.mrb[0].mxu0
    %v982 = vadd.f32 0.0, %v981
    %v983 = vpop.f32.mrb[0].mxu0
    %984 = vmatprep.mubr.f32.mxu0 0.0
    %985 = vmatmul.mubr.f32.gmra.mrb[0].mxu0 %v899
    %v986 = vpop.f32.mrb[0].mxu0
    %v987 = vadd.f32 0.0, %v986
    %v988 = vpop.f32.mrb[0].mxu0
    %989 = vdwg.mxu0
    %v991 = vlaneseq
    %v992 = vshrl.u32 %v991, 7
    %v993 = vsub.s32 0, %v992
    %v994 = vrot.slane %v873, %v993
    %v996 = vadd.f32 %v994, %v972
    %v997 = vadd.f32 %v994, %v977
    %v998 = vadd.f32 %v994, %v982
    %v999 = vadd.f32 %v994, %v987
    %v1000 = vmul.f32 %v859, 0.01
    %v1001 = vmul.f32 %v860, 0.01
    %v1002 = vmax.f32 %v859, %v1000
    %v1003 = vmax.f32 %v860, %v1001
    %1006 = vrot.lane.b32.xlu0 %v1002, 64
    %v1007 = vpop.permute.xlu0 %1006
    %1008 = vrot.lane.b32.xlu0 %v1003, 64
    %v1009 = vpop.permute.xlu0 %1008
    %s1010 = scalar_lea.vmem %s3, 64
    %v1011 = vld [vmem:[%s1010] sm:$0xff]
    %v1012 = vld [vmem:[%s1010 + $0x8] sm:$0xff]
    %v1013 = vld [vmem:[%s1010 + $0x10] sm:$0xff]
    %v1014 = vld [vmem:[%s1010 + $0x18] sm:$0xff]
    %v1015 = vld [vmem:[%s1010 + $0x20] sm:$0xff]
    %v1016 = vld [vmem:[%s1010 + $0x28] sm:$0xff]
    %v1017 = vld [vmem:[%s1010 + $0x30] sm:$0xff]
    %v1018 = vld [vmem:[%s1010 + $0x38] sm:$0xf]
    %v1019 = vsel %vm892, %v1002, 0
    %v1021 = vsel %vm892, %v1003, 0
    %v1023 = vsel %vm892, %v1007, 0
    %v1025 = vsel %vm892, %v1009, 0
    %v1028 = vsel %vm901, %v1018, 0
    %1030 = vmatprep.subr.mxu0 0.0
    %1031 = vmatpush1.msra.mxu0 %v1011
    %1032 = vmatprep.subr.mxu0 0.0
    %1033 = vmatpush1.msra.mxu0 %v1012
    %1034 = vmatprep.subr.mxu0 0.0
    %1035 = vmatpush1.msra.mxu0 %v1013
    %1036 = vmatprep.subr.mxu0 0.0
    %1037 = vmatpush1.msra.mxu0 %v1014
    %1038 = vmatprep.subr.mxu0 0.0
    %1039 = vmatpush1.msra.mxu0 %v1015
    %1040 = vmatprep.subr.mxu0 0.0
    %1041 = vmatpush1.msra.mxu0 %v1016
    %1042 = vmatprep.subr.mxu0 0.0
    %1043 = vmatpush1.msra.mxu0 %v1017
    %1044 = vmatprep.subr.mxu0 0.0
    %1045 = vmatpush1.msra.mxu0 %v1028
    %1046 = vmatprep.subr.mxu0 0.0
    %1047 = vmatpush1.msra.mxu0 0.0
    %1048 = vmatprep.subr.mxu0 0.0
    %1049 = vmatpush1.msra.mxu0 0.0
    %1050 = vmatprep.subr.mxu0 0.0
    %1051 = vmatpush1.msra.mxu0 0.0
    %1052 = vmatprep.subr.mxu0 0.0
    %1053 = vmatpush1.msra.mxu0 0.0
    %1054 = vmatprep.subr.mxu0 0.0
    %1055 = vmatpush1.msra.mxu0 0.0
    %1056 = vmatprep.subr.mxu0 0.0
    %1057 = vmatpush1.msra.mxu0 0.0
    %1058 = vmatprep.subr.mxu0 0.0
    %1059 = vmatpush1.msra.mxu0 0.0
    %1060 = vmatprep.subr.mxu0 0.0
    %1061 = vmatpush1.msra.mxu0 0.0
    %1062 = vmatprep.subr.mxu0 0.0
    %1063 = vmatpush1.msra.mxu0 0.0
    %1064 = vmatprep.subr.mxu0 0.0
    %1065 = vmatpush1.msra.mxu0 0.0
    %1066 = vmatprep.subr.mxu0 0.0
    %1067 = vmatpush1.msra.mxu0 0.0
    %1068 = vmatprep.subr.mxu0 0.0
    %1069 = vmatpush1.msra.mxu0 0.0
    %1070 = vmatprep.subr.mxu0 0.0
    %1071 = vmatpush1.msra.mxu0 0.0
    %1072 = vmatprep.subr.mxu0 0.0
    %1073 = vmatpush1.msra.mxu0 0.0
    %1074 = vmatprep.subr.mxu0 0.0
    %1075 = vmatpush1.msra.mxu0 0.0
    %1076 = vmatprep.subr.mxu0 0.0
    %1077 = vmatpush1.msra.mxu0 0.0
    %1078 = vmatprep.subr.mxu0 0.0
    %1079 = vmatpush1.msra.mxu0 0.0
    %1080 = vmatprep.subr.mxu0 0.0
    %1081 = vmatpush1.msra.mxu0 0.0
    %1082 = vmatprep.subr.mxu0 0.0
    %1083 = vmatpush1.msra.mxu0 0.0
    %1084 = vmatprep.subr.mxu0 0.0
    %1085 = vmatpush1.msra.mxu0 0.0
    %1086 = vmatprep.subr.mxu0 0.0
    %1087 = vmatpush1.msra.mxu0 0.0
    %1088 = vmatprep.subr.mxu0 0.0
    %1089 = vmatpush1.msra.mxu0 0.0
    %1090 = vmatprep.subr.mxu0 0.0
    %1091 = vmatpush1.msra.mxu0 0.0
    %1092 = vmatprep.subr.mxu0 0.0
    %1093 = vmatpush1.msra.mxu0 0.0
    %1094 = vmatprep.mubr.f32.mxu0 0.0
    %1095 = vmatmul.mubr.f32.gmra.mrb[0].mxu0 %v1019
    %v1096 = vpop.f32.mrb[0].mxu0
    %v1097 = vadd.f32 0.0, %v1096
    %v1098 = vpop.f32.mrb[0].mxu0
    %1099 = vmatprep.mubr.f32.mxu0 0.0
    %1100 = vmatmul.mubr.f32.gmra.mrb[0].mxu0 %v1021
    %v1101 = vpop.f32.mrb[0].mxu0
    %v1102 = vadd.f32 0.0, %v1101
    %v1103 = vpop.f32.mrb[0].mxu0
    %1104 = vmatprep.mubr.f32.mxu0 0.0
    %1105 = vmatmul.mubr.f32.gmra.mrb[0].mxu0 %v1023
    %v1106 = vpop.f32.mrb[0].mxu0
    %v1107 = vadd.f32 0.0, %v1106
    %v1108 = vpop.f32.mrb[0].mxu0
    %1109 = vmatprep.mubr.f32.mxu0 0.0
    %1110 = vmatmul.mubr.f32.gmra.mrb[0].mxu0 %v1025
    %v1111 = vpop.f32.mrb[0].mxu0
    %v1112 = vadd.f32 0.0, %v1111
    %v1113 = vpop.f32.mrb[0].mxu0
    %1114 = vdwg.mxu0
    %v1115 = vadd.f32 %v996, %v1097
    %v1116 = vadd.f32 %v997, %v1102
    %v1117 = vadd.f32 %v998, %v1107
    %v1118 = vadd.f32 %v999, %v1112
    %v1119 = vmul.f32 %v865, 0.01
    %v1120 = vmul.f32 %v866, 0.01
    %v1121 = vmax.f32 %v865, %v1119
    %v1122 = vmax.f32 %v866, %v1120
    %1125 = vrot.lane.b32.xlu0 %v1121, 64
    %v1126 = vpop.permute.xlu0 %1125
    %1127 = vrot.lane.b32.xlu0 %v1122, 64
    %v1128 = vpop.permute.xlu0 %1127
    %s1129 = scalar_lea.vmem %s3, 128
    %v1130 = vld [vmem:[%s1129] sm:$0xff]
    %v1131 = vld [vmem:[%s1129 + $0x8] sm:$0xff]
    %v1132 = vld [vmem:[%s1129 + $0x10] sm:$0xff]
    %v1133 = vld [vmem:[%s1129 + $0x18] sm:$0xff]
    %v1134 = vld [vmem:[%s1129 + $0x20] sm:$0xff]
    %v1135 = vld [vmem:[%s1129 + $0x28] sm:$0xff]
    %v1136 = vld [vmem:[%s1129 + $0x30] sm:$0xff]
    %v1137 = vld [vmem:[%s1129 + $0x38] sm:$0xf]
    %v1138 = vsel %vm892, %v1121, 0
    %v1140 = vsel %vm892, %v1122, 0
    %v1142 = vsel %vm892, %v1126, 0
    %v1144 = vsel %vm892, %v1128, 0
    %v1147 = vsel %vm901, %v1137, 0
    %1149 = vmatprep.subr.mxu0 0.0
    %1150 = vmatpush1.msra.mxu0 %v1130
    %1151 = vmatprep.subr.mxu0 0.0
    %1152 = vmatpush1.msra.mxu0 %v1131
    %1153 = vmatprep.subr.mxu0 0.0
    %1154 = vmatpush1.msra.mxu0 %v1132
    %1155 = vmatprep.subr.mxu0 0.0
    %1156 = vmatpush1.msra.mxu0 %v1133
    %1157 = vmatprep.subr.mxu0 0.0
    %1158 = vmatpush1.msra.mxu0 %v1134
    %1159 = vmatprep.subr.mxu0 0.0
    %1160 = vmatpush1.msra.mxu0 %v1135
    %1161 = vmatprep.subr.mxu0 0.0
    %1162 = vmatpush1.msra.mxu0 %v1136
    %1163 = vmatprep.subr.mxu0 0.0
    %1164 = vmatpush1.msra.mxu0 %v1147
    %1165 = vmatprep.subr.mxu0 0.0
    %1166 = vmatpush1.msra.mxu0 0.0
    %1167 = vmatprep.subr.mxu0 0.0
    %1168 = vmatpush1.msra.mxu0 0.0
    %1169 = vmatprep.subr.mxu0 0.0
    %1170 = vmatpush1.msra.mxu0 0.0
    %1171 = vmatprep.subr.mxu0 0.0
    %1172 = vmatpush1.msra.mxu0 0.0
    %1173 = vmatprep.subr.mxu0 0.0
    %1174 = vmatpush1.msra.mxu0 0.0
    %1175 = vmatprep.subr.mxu0 0.0
    %1176 = vmatpush1.msra.mxu0 0.0
    %1177 = vmatprep.subr.mxu0 0.0
    %1178 = vmatpush1.msra.mxu0 0.0
    %1179 = vmatprep.subr.mxu0 0.0
    %1180 = vmatpush1.msra.mxu0 0.0
    %1181 = vmatprep.subr.mxu0 0.0
    %1182 = vmatpush1.msra.mxu0 0.0
    %1183 = vmatprep.subr.mxu0 0.0
    %1184 = vmatpush1.msra.mxu0 0.0
    %1185 = vmatprep.subr.mxu0 0.0
    %1186 = vmatpush1.msra.mxu0 0.0
    %1187 = vmatprep.subr.mxu0 0.0
    %1188 = vmatpush1.msra.mxu0 0.0
    %1189 = vmatprep.subr.mxu0 0.0
    %1190 = vmatpush1.msra.mxu0 0.0
    %1191 = vmatprep.subr.mxu0 0.0
    %1192 = vmatpush1.msra.mxu0 0.0
    %1193 = vmatprep.subr.mxu0 0.0
    %1194 = vmatpush1.msra.mxu0 0.0
    %1195 = vmatprep.subr.mxu0 0.0
    %1196 = vmatpush1.msra.mxu0 0.0
    %1197 = vmatprep.subr.mxu0 0.0
    %1198 = vmatpush1.msra.mxu0 0.0
    %1199 = vmatprep.subr.mxu0 0.0
    %1200 = vmatpush1.msra.mxu0 0.0
    %1201 = vmatprep.subr.mxu0 0.0
    %1202 = vmatpush1.msra.mxu0 0.0
    %1203 = vmatprep.subr.mxu0 0.0
    %1204 = vmatpush1.msra.mxu0 0.0
    %1205 = vmatprep.subr.mxu0 0.0
    %1206 = vmatpush1.msra.mxu0 0.0
    %1207 = vmatprep.subr.mxu0 0.0
    %1208 = vmatpush1.msra.mxu0 0.0
    %1209 = vmatprep.subr.mxu0 0.0
    %1210 = vmatpush1.msra.mxu0 0.0
    %1211 = vmatprep.subr.mxu0 0.0
    %1212 = vmatpush1.msra.mxu0 0.0
    %1213 = vmatprep.mubr.f32.mxu0 0.0
    %1214 = vmatmul.mubr.f32.gmra.mrb[0].mxu0 %v1138
    %v1215 = vpop.f32.mrb[0].mxu0
    %v1216 = vadd.f32 0.0, %v1215
    %v1217 = vpop.f32.mrb[0].mxu0
    %1218 = vmatprep.mubr.f32.mxu0 0.0
    %1219 = vmatmul.mubr.f32.gmra.mrb[0].mxu0 %v1140
    %v1220 = vpop.f32.mrb[0].mxu0
    %v1221 = vadd.f32 0.0, %v1220
    %v1222 = vpop.f32.mrb[0].mxu0
    %1223 = vmatprep.mubr.f32.mxu0 0.0
    %1224 = vmatmul.mubr.f32.gmra.mrb[0].mxu0 %v1142
    %v1225 = vpop.f32.mrb[0].mxu0
    %v1226 = vadd.f32 0.0, %v1225
    %v1227 = vpop.f32.mrb[0].mxu0
    %1228 = vmatprep.mubr.f32.mxu0 0.0
    %1229 = vmatmul.mubr.f32.gmra.mrb[0].mxu0 %v1144
    %v1230 = vpop.f32.mrb[0].mxu0
    %v1231 = vadd.f32 0.0, %v1230
    %v1232 = vpop.f32.mrb[0].mxu0
    %1233 = vdwg.mxu0
    %v1234 = vadd.f32 %v1115, %v1216
    %v1235 = vadd.f32 %v1116, %v1221
    %v1236 = vadd.f32 %v1117, %v1226
    %v1237 = vadd.f32 %v1118, %v1231
    %v1238 = vmul.f32 %v871, 0.01
    %v1239 = vmul.f32 %v872, 0.01
    %v1240 = vmax.f32 %v871, %v1238
    %v1241 = vmax.f32 %v872, %v1239
    %1244 = vrot.lane.b32.xlu0 %v1240, 64
    %v1245 = vpop.permute.xlu0 %1244
    %1246 = vrot.lane.b32.xlu0 %v1241, 64
    %v1247 = vpop.permute.xlu0 %1246
    %s1248 = scalar_lea.vmem %s3, 192
    %v1249 = vld [vmem:[%s1248] sm:$0xff]
    %v1250 = vld [vmem:[%s1248 + $0x8] sm:$0xff]
    %v1251 = vld [vmem:[%s1248 + $0x10] sm:$0xff]
    %v1252 = vld [vmem:[%s1248 + $0x18] sm:$0xff]
    %v1253 = vld [vmem:[%s1248 + $0x20] sm:$0xff]
    %v1254 = vld [vmem:[%s1248 + $0x28] sm:$0xff]
    %v1255 = vld [vmem:[%s1248 + $0x30] sm:$0xff]
    %v1256 = vld [vmem:[%s1248 + $0x38] sm:$0xf]
    %v1257 = vsel %vm892, %v1240, 0
    %v1259 = vsel %vm892, %v1241, 0
    %v1261 = vsel %vm892, %v1245, 0
    %v1263 = vsel %vm892, %v1247, 0
    %v1266 = vsel %vm901, %v1256, 0
    %1268 = vmatprep.subr.mxu0 0.0
    %1269 = vmatpush1.msra.mxu0 %v1249
    %1270 = vmatprep.subr.mxu0 0.0
    %1271 = vmatpush1.msra.mxu0 %v1250
    %1272 = vmatprep.subr.mxu0 0.0
    %1273 = vmatpush1.msra.mxu0 %v1251
    %1274 = vmatprep.subr.mxu0 0.0
    %1275 = vmatpush1.msra.mxu0 %v1252
    %1276 = vmatprep.subr.mxu0 0.0
    %1277 = vmatpush1.msra.mxu0 %v1253
    %1278 = vmatprep.subr.mxu0 0.0
    %1279 = vmatpush1.msra.mxu0 %v1254
    %1280 = vmatprep.subr.mxu0 0.0
    %1281 = vmatpush1.msra.mxu0 %v1255
    %1282 = vmatprep.subr.mxu0 0.0
    %1283 = vmatpush1.msra.mxu0 %v1266
    %1284 = vmatprep.subr.mxu0 0.0
    %1285 = vmatpush1.msra.mxu0 0.0
    %1286 = vmatprep.subr.mxu0 0.0
    %1287 = vmatpush1.msra.mxu0 0.0
    %1288 = vmatprep.subr.mxu0 0.0
    %1289 = vmatpush1.msra.mxu0 0.0
    %1290 = vmatprep.subr.mxu0 0.0
    %1291 = vmatpush1.msra.mxu0 0.0
    %1292 = vmatprep.subr.mxu0 0.0
    %1293 = vmatpush1.msra.mxu0 0.0
    %1294 = vmatprep.subr.mxu0 0.0
    %1295 = vmatpush1.msra.mxu0 0.0
    %1296 = vmatprep.subr.mxu0 0.0
    %1297 = vmatpush1.msra.mxu0 0.0
    %1298 = vmatprep.subr.mxu0 0.0
    %1299 = vmatpush1.msra.mxu0 0.0
    %1300 = vmatprep.subr.mxu0 0.0
    %1301 = vmatpush1.msra.mxu0 0.0
    %1302 = vmatprep.subr.mxu0 0.0
    %1303 = vmatpush1.msra.mxu0 0.0
    %1304 = vmatprep.subr.mxu0 0.0
    %1305 = vmatpush1.msra.mxu0 0.0
    %1306 = vmatprep.subr.mxu0 0.0
    %1307 = vmatpush1.msra.mxu0 0.0
    %1308 = vmatprep.subr.mxu0 0.0
    %1309 = vmatpush1.msra.mxu0 0.0
    %1310 = vmatprep.subr.mxu0 0.0
    %1311 = vmatpush1.msra.mxu0 0.0
    %1312 = vmatprep.subr.mxu0 0.0
    %1313 = vmatpush1.msra.mxu0 0.0
    %1314 = vmatprep.subr.mxu0 0.0
    %1315 = vmatpush1.msra.mxu0 0.0
    %1316 = vmatprep.subr.mxu0 0.0
    %1317 = vmatpush1.msra.mxu0 0.0
    %1318 = vmatprep.subr.mxu0 0.0
    %1319 = vmatpush1.msra.mxu0 0.0
    %1320 = vmatprep.subr.mxu0 0.0
    %1321 = vmatpush1.msra.mxu0 0.0
    %1322 = vmatprep.subr.mxu0 0.0
    %1323 = vmatpush1.msra.mxu0 0.0
    %1324 = vmatprep.subr.mxu0 0.0
    %1325 = vmatpush1.msra.mxu0 0.0
    %1326 = vmatprep.subr.mxu0 0.0
    %1327 = vmatpush1.msra.mxu0 0.0
    %1328 = vmatprep.subr.mxu0 0.0
    %1329 = vmatpush1.msra.mxu0 0.0
    %1330 = vmatprep.subr.mxu0 0.0
    %1331 = vmatpush1.msra.mxu0 0.0
    %1332 = vmatprep.mubr.f32.mxu0 0.0
    %1333 = vmatmul.mubr.f32.gmra.mrb[0].mxu0 %v1257
    %v1334 = vpop.f32.mrb[0].mxu0
    %v1335 = vadd.f32 0.0, %v1334
    %v1336 = vpop.f32.mrb[0].mxu0
    %1337 = vmatprep.mubr.f32.mxu0 0.0
    %1338 = vmatmul.mubr.f32.gmra.mrb[0].mxu0 %v1259
    %v1339 = vpop.f32.mrb[0].mxu0
    %v1340 = vadd.f32 0.0, %v1339
    %v1341 = vpop.f32.mrb[0].mxu0
    %1342 = vmatprep.mubr.f32.mxu0 0.0
    %1343 = vmatmul.mubr.f32.gmra.mrb[0].mxu0 %v1261
    %v1344 = vpop.f32.mrb[0].mxu0
    %v1345 = vadd.f32 0.0, %v1344
    %v1346 = vpop.f32.mrb[0].mxu0
    %1347 = vmatprep.mubr.f32.mxu0 0.0
    %1348 = vmatmul.mubr.f32.gmra.mrb[0].mxu0 %v1263
    %v1349 = vpop.f32.mrb[0].mxu0
    %v1350 = vadd.f32 0.0, %v1349
    %v1351 = vpop.f32.mrb[0].mxu0
    %1352 = vdwg.mxu0
    %v1353 = vadd.f32 %v1234, %v1335
    %v1354 = vadd.f32 %v1235, %v1340
    %v1355 = vadd.f32 %v1236, %v1345
    %v1356 = vadd.f32 %v1237, %v1350
    %v1357 = vmul.f32 %v1353, 0.01
    %v1358 = vmul.f32 %v1354, 0.01
    %v1359 = vmul.f32 %v1355, 0.01
    %v1360 = vmul.f32 %v1356, 0.01
    %v1361 = vmax.f32 %v1353, %v1357
    %v1362 = vmax.f32 %v1354, %v1358
    %v1363 = vmax.f32 %v1355, %v1359
    %v1364 = vmax.f32 %v1356, %v1360
    %v1365 = vld [vmem:[%s5] sm:$0x1]
    %v1367 = vlaneseq
    %v1368 = vshrl.u32 %v1367, 7
    %v1369 = vsub.s32 0, %v1368
    %v1370 = vrot.slane %v1365, %v1369
    %v1372 = vmul.f32 %v1361, %v1370
    %v1373 = vmul.f32 %v1362, %v1370
    %v1374 = vmul.f32 %v1363, %v1370
    %v1375 = vmul.f32 %v1364, %v1370
    %1376 = vadd.xlane.f32.xlu0 %v1372
    %v1377 = vpop.xlane.xlu0 %1376
    %1378 = vadd.xlane.f32.xlu0 %v1373
    %v1379 = vpop.xlane.xlu0 %1378
    %1380 = vadd.xlane.f32.xlu0 %v1374
    %v1381 = vpop.xlane.xlu0 %1380
    %1382 = vadd.xlane.f32.xlu0 %v1375
    %v1383 = vpop.xlane.xlu0 %1382
    %s1384 = sld [smem:[#allocation2]]
    %v1385 = vstv %s1384
    %v1386 = vadd.f32 %v1377, %v1385
    %v1387 = vadd.f32 %v1379, %v1385
    %v1388 = vadd.f32 %v1381, %v1385
    %v1389 = vadd.f32 %v1383, %v1385
    %vm1390 = vcmask 7168
    %1391 = vst.msk [vmem:[%s7] sm:$0xff] %vm1390, %v1386
    %1392 = vst.msk [vmem:[%s7 + $0x8] sm:$0xff] %vm1390, %v1387
    %1393 = vst.msk [vmem:[%s7 + $0x10] sm:$0xff] %vm1390, %v1388
    %1394 = vst.msk [vmem:[%s7 + $0x18] sm:$0xff] %vm1390, %v1389
    // Predicated region
    $region38: #{cnn2_forward.1} parent=1 // pred_check
      _
    $region39: #{cnn2_forward.1} parent=1 // pred_check_branch
      %1396 = sbr.rel (0) target = $region41
    $region40: #{cnn2_forward.1} parent=1 // pred_region
      _
    $region41: #{cnn2_forward.1} parent=1 // pred_fallthru
      _
    // Predicated region
    $region42: #{cnn2_forward.1} parent=1 // pred_check
      _
    $region43: #{cnn2_forward.1} parent=1 // pred_check_branch
      %1398 = sbr.rel (0) target = $region45
    $region44: #{cnn2_forward.1} parent=1 // pred_region
      _
    $region45: #{cnn2_forward.1} parent=1 // pred_fallthru
      _
    %1399 = vsyncpa [#allocation4], 1
    %1400 = vsyncpa [#allocation6], 1

</llo_original>
